<compile_context>
chip_gen: v7x
topology: tpu7x:2x2x1
jax: 0.10.0
libtpu: 0.0.40
codegen_flags: <defaults>
</compile_context>

<pallas_src>
import functools

import jax
import jax.numpy as jnp
from jax.experimental import pallas as pl
from jax.experimental.pallas import tpu as pltpu

LANE = 128  # TPU vreg lane width


def _round_up(n, m):
    return (n + m - 1) // m * m


def _pick_tb(B):
    """Batch tile: big enough to amortize per-grid-step overhead (v5e/v6e are
    single-TC), but keep >= 2 grid steps when B allows so both v7x TCs work."""
    if B <= 16:
        return B
    if B >= 1024:
        return 512
    return min(512, _round_up(pl.cdiv(B, 2), 8))


def generator_kernel(x_ref,
                     w1_ref, b1_ref, w2_ref, b2_ref, w34_ref, b34_ref,
                     w5_ref, b5_ref, w6_ref, b6_ref,
                     o_ref, *, act_dtype):
    """One batch tile of the fused 5-matmul MLP (layers 3/4 pre-fused)."""
    # Load the (tb, D) tile once, cast once to the MXU dtype, and zero-pad the
    # lanes up to W1's padded K inside VMEM (no HBM-side pad copy).
    x = x_ref[...].astype(w1_ref.dtype)
    pad = w1_ref.shape[0] - x.shape[1]
    if pad > 0:
        x = jnp.concatenate(
            [x, jnp.zeros((x.shape[0], pad), dtype=x.dtype)], axis=1)

    def linear(h, w_ref, b_ref):
        w = w_ref[...]
        return jnp.dot(h.astype(w.dtype), w,
                       preferred_element_type=jnp.float32) + b_ref[...]

    def tanh_act(v):
        # Bias-add happens on the f32 accumulator; tanh runs in `act_dtype`
        # (bf16 by default: native EUP/VPU path on v6e/v7x and half the VMEM
        # traffic for the (tb, 256)/(tb, 128) intermediates).
        return jnp.tanh(v.astype(act_dtype))

    h = tanh_act(linear(x, w1_ref, b1_ref))     # Linear(D,256)   + Tanh
    h = tanh_act(linear(h, w2_ref, b2_ref))     # Linear(256,128) + Tanh
    h = tanh_act(linear(h, w34_ref, b34_ref))   # Linear(128,Z)+Linear(Z,128)+Tanh (fused)
    h = tanh_act(linear(h, w5_ref, b5_ref))     # Linear(128,256) + Tanh
    y = linear(h, w6_ref, b6_ref)               # Linear(256,D)
    o_ref[...] = y.astype(o_ref.dtype)


def generator_forward(x, params, *, tb=None,
                      weight_dtype=jnp.bfloat16, act_dtype=jnp.bfloat16):
    """x: (B, input_dim) float32.  params: list of 6 (W, b) with W as (in, out).

    Note: the latent z is not materialized (the Z-bottleneck linears are
    algebraically fused); semantics of the returned y are unchanged.
    """
    B, D = x.shape
    (w1, b1), (w2, b2), (w3, b3), (w4, b4), (w5, b5), (w6, b6) = params

    # Fuse the two Z-bottleneck linears (no nonlinearity between them):
    #   (h @ W3 + b3) @ W4 + b4 == h @ (W3 @ W4) + (b3 @ W4 + b4)
    hi = jax.lax.Precision.HIGHEST
    w34 = jnp.dot(w3, w4, precision=hi)
    b34 = jnp.dot(b3, w4, precision=hi) + b4

    # Pad W1's K-rows to a full 128-lane tile; the kernel zero-pads x's lanes
    # to match, so the extra rows contribute exactly 0.
    k1 = _round_up(D, LANE)
    w1p = jnp.pad(w1, ((0, k1 - D), (0, 0)))

    weights = [w1p, w2, w34, w5, w6]
    biases = [b1, b2, b34, b5, b6]

    if tb is None:
        tb = _pick_tb(B)
    grid = (pl.cdiv(B, tb),)

    flat = []
    in_specs = [pl.BlockSpec((tb, D), lambda i: (i, 0))]
    for w, b in zip(weights, biases):
        wq = w.astype(weight_dtype)
        br = b.astype(jnp.float32).reshape(1, -1)
        flat.append(wq)
        flat.append(br)
        # Grid-invariant index maps: weights/biases stay VMEM-resident across
        # all batch tiles (total < 0.5 MB on every TPU generation).
        in_specs.append(pl.BlockSpec(wq.shape, lambda i: (0, 0)))
        in_specs.append(pl.BlockSpec(br.shape, lambda i: (0, 0)))

    # Advisory cost estimate for the XLA scheduler.
    flops = 2 * B * sum(w.shape[0] * w.shape[1] for w in weights)
    transcendentals = B * (b1.shape[0] + b2.shape[0] + b34.shape[0] + b5.shape[0])
    bytes_accessed = (x.size * x.dtype.itemsize
                      + B * D * x.dtype.itemsize
                      + sum(w.size * jnp.dtype(weight_dtype).itemsize
                            for w in weights)
                      + sum(b.size * 4 for b in biases))

    out = pl.pallas_call(
        functools.partial(generator_kernel, act_dtype=act_dtype),
        out_shape=jax.ShapeDtypeStruct((B, D), x.dtype),
        grid_spec=pltpu.PrefetchScalarGridSpec(
            num_scalar_prefetch=0,
            grid=grid,
            in_specs=in_specs,
            out_specs=pl.BlockSpec((tb, D), lambda i: (i, 0)),
        ),
        compiler_params=pltpu.CompilerParams(
            dimension_semantics=("parallel",)),
        cost_estimate=pl.CostEstimate(
            flops=flops,
            transcendentals=transcendentals,
            bytes_accessed=bytes_accessed),
    )(x, *flat)

    return out


def init_params(key, input_dim, z_dim):
    """Deterministic init; weights stored as (in_features, out_features)."""
    dims = [(input_dim, 256), (256, 128), (128, z_dim),      # encoder
            (z_dim, 128), (128, 256), (256, input_dim)]      # decoder
    params = []
    for (fan_in, fan_out) in dims:
        key, kw, kb = jax.random.split(key, 3)
        bound = 1.0 / jnp.sqrt(fan_in)
        w = jax.random.uniform(kw, (fan_in, fan_out), jnp.float32, -bound, bound)
        b = jax.random.uniform(kb, (fan_out,), jnp.float32, -bound, bound)
        params.append((w, b))
    return params


def generator_ref(x, params):
    """Pure-JAX f32 reference (unfused, matches the torch module layer-by-layer)."""
    h = jnp.tanh(x @ params[0][0] + params[0][1])
    h = jnp.tanh(h @ params[1][0] + params[1][1])
    h = h @ params[2][0] + params[2][1]
    h = jnp.tanh(h @ params[3][0] + params[3][1])
    h = jnp.tanh(h @ params[4][0] + params[4][1])
    return h @ params[5][0] + params[5][1]


if __name__ == "__main__":
    key = jax.random.PRNGKey(0)
    # B=300 exercises the ragged 2-tile "parallel" grid (no batch padding).
    B, input_dim, z_dim = 300, 64, 32

    kx, kp = jax.random.split(key)
    x = jax.random.normal(kx, (B, input_dim), jnp.float32)
    params = init_params(kp, input_dim, z_dim)

    ref = generator_ref(x, params)

    # Default path: bf16 weights + bf16 tanh, f32 MXU accumulation.
    out = jax.block_until_ready(generator_forward(x, params))
    assert out.shape == (B, input_dim)
    assert jnp.allclose(out, ref, atol=5e-2, rtol=5e-2), \
        float(jnp.max(jnp.abs(out - ref)))

    # f32-weight / f32-activation path (numerics check; fusion changes bitwise
    # results slightly, so use a slightly looser tolerance than pure-layerwise).
    out_f32 = jax.block_until_ready(
        generator_forward(x, params, tb=128,
                          weight_dtype=jnp.float32, act_dtype=jnp.float32))
    assert jnp.allclose(out_f32, ref, atol=1e-3, rtol=1e-3), \
        float(jnp.max(jnp.abs(out_f32 - ref)))

    print("KERNEL_OK")
</pallas_src>

<mosaic_0001>
module attributes {stable_mosaic.version = 11 : i64} {
  func.func @generator_kernel(%arg0: i32, %arg1: memref<152x64xf32, #tpu.memory_space<vmem>>, %arg2: memref<128x256xbf16, #tpu.memory_space<vmem>>, %arg3: memref<1x256xf32, #tpu.memory_space<vmem>>, %arg4: memref<256x128xbf16, #tpu.memory_space<vmem>>, %arg5: memref<1x128xf32, #tpu.memory_space<vmem>>, %arg6: memref<128x128xbf16, #tpu.memory_space<vmem>>, %arg7: memref<1x128xf32, #tpu.memory_space<vmem>>, %arg8: memref<128x256xbf16, #tpu.memory_space<vmem>>, %arg9: memref<1x256xf32, #tpu.memory_space<vmem>>, %arg10: memref<256x64xbf16, #tpu.memory_space<vmem>>, %arg11: memref<1x64xf32, #tpu.memory_space<vmem>>, %arg12: memref<152x64xf32, #tpu.memory_space<vmem>>) attributes {dimension_semantics = [#tpu.dimension_semantics<parallel>], iteration_bounds = array<i64: 2>, scalar_prefetch = 0 : i64, scratch_operands = 0 : i64, tpu.core_type = #tpu.core_type<tc>, window_params = [{transform_indices = @transform_0, window_bounds = array<i64: 152, 64>}, {pipeline_mode = #tpu.pipeline_mode<synchronous>, transform_indices = @transform_1, window_bounds = array<i64: 128, 256>}, {pipeline_mode = #tpu.pipeline_mode<synchronous>, transform_indices = @transform_2, window_bounds = array<i64: 1, 256>}, {pipeline_mode = #tpu.pipeline_mode<synchronous>, transform_indices = @transform_3, window_bounds = array<i64: 256, 128>}, {pipeline_mode = #tpu.pipeline_mode<synchronous>, transform_indices = @transform_4, window_bounds = array<i64: 1, 128>}, {pipeline_mode = #tpu.pipeline_mode<synchronous>, transform_indices = @transform_5, window_bounds = array<i64: 128, 128>}, {pipeline_mode = #tpu.pipeline_mode<synchronous>, transform_indices = @transform_6, window_bounds = array<i64: 1, 128>}, {pipeline_mode = #tpu.pipeline_mode<synchronous>, transform_indices = @transform_7, window_bounds = array<i64: 128, 256>}, {pipeline_mode = #tpu.pipeline_mode<synchronous>, transform_indices = @transform_8, window_bounds = array<i64: 1, 256>}, {pipeline_mode = #tpu.pipeline_mode<synchronous>, transform_indices = @transform_9, window_bounds = array<i64: 256, 64>}, {pipeline_mode = #tpu.pipeline_mode<synchronous>, transform_indices = @transform_10, window_bounds = array<i64: 1, 64>}, {transform_indices = @transform_11, window_bounds = array<i64: 152, 64>}]} {
    %c0 = arith.constant 0 : index
    %c0_0 = arith.constant 0 : index
    %0 = vector.load %arg1[%c0, %c0_0] : memref<152x64xf32, #tpu.memory_space<vmem>>, vector<152x64xf32>
    %1 = arith.truncf %0 : vector<152x64xf32> to vector<152x64xbf16>
    %cst = arith.constant 0.000000e+00 : bf16
    %2 = vector.broadcast %cst : bf16 to vector<152x64xbf16>
    %3 = tpu.concatenate %1, %2 in 1 : vector<152x64xbf16>, vector<152x64xbf16> -> vector<152x128xbf16>
    %c0_1 = arith.constant 0 : index
    %c0_2 = arith.constant 0 : index
    %4 = vector.load %arg2[%c0_1, %c0_2] : memref<128x256xbf16, #tpu.memory_space<vmem>>, vector<128x256xbf16>
    %cst_3 = arith.constant dense<0.000000e+00> : vector<152x256xf32>
    %5 = tpu.matmul %3, %4, %cst_3 {dimension_numbers = #tpu.dot_dimension_numbers<[1], [0], [0], [1], [0, 0, 1, 1], [], []>} : vector<152x128xbf16>, vector<128x256xbf16>, vector<152x256xf32> -> vector<152x256xf32>
    %c0_4 = arith.constant 0 : index
    %c0_5 = arith.constant 0 : index
    %6 = vector.load %arg3[%c0_4, %c0_5] : memref<1x256xf32, #tpu.memory_space<vmem>>, vector<1x256xf32>
    %7 = vector.broadcast %6 : vector<1x256xf32> to vector<152x256xf32>
    %8 = arith.addf %5, %7 : vector<152x256xf32>
    %9 = arith.truncf %8 : vector<152x256xf32> to vector<152x256xbf16>
    %10 = math.tanh %9 : vector<152x256xbf16>
    %c0_6 = arith.constant 0 : index
    %c0_7 = arith.constant 0 : index
    %11 = vector.load %arg4[%c0_6, %c0_7] : memref<256x128xbf16, #tpu.memory_space<vmem>>, vector<256x128xbf16>
    %cst_8 = arith.constant dense<0.000000e+00> : vector<152x128xf32>
    %12 = tpu.matmul %10, %11, %cst_8 {dimension_numbers = #tpu.dot_dimension_numbers<[1], [0], [0], [1], [0, 0, 1, 1], [], []>} : vector<152x256xbf16>, vector<256x128xbf16>, vector<152x128xf32> -> vector<152x128xf32>
    %c0_9 = arith.constant 0 : index
    %c0_10 = arith.constant 0 : index
    %13 = vector.load %arg5[%c0_9, %c0_10] : memref<1x128xf32, #tpu.memory_space<vmem>>, vector<1x128xf32>
    %14 = vector.broadcast %13 : vector<1x128xf32> to vector<152x128xf32>
    %15 = arith.addf %12, %14 : vector<152x128xf32>
    %16 = arith.truncf %15 : vector<152x128xf32> to vector<152x128xbf16>
    %17 = math.tanh %16 : vector<152x128xbf16>
    %c0_11 = arith.constant 0 : index
    %c0_12 = arith.constant 0 : index
    %18 = vector.load %arg6[%c0_11, %c0_12] : memref<128x128xbf16, #tpu.memory_space<vmem>>, vector<128x128xbf16>
    %cst_13 = arith.constant dense<0.000000e+00> : vector<152x128xf32>
    %19 = tpu.matmul %17, %18, %cst_13 {dimension_numbers = #tpu.dot_dimension_numbers<[1], [0], [0], [1], [0, 0, 1, 1], [], []>} : vector<152x128xbf16>, vector<128x128xbf16>, vector<152x128xf32> -> vector<152x128xf32>
    %c0_14 = arith.constant 0 : index
    %c0_15 = arith.constant 0 : index
    %20 = vector.load %arg7[%c0_14, %c0_15] : memref<1x128xf32, #tpu.memory_space<vmem>>, vector<1x128xf32>
    %21 = vector.broadcast %20 : vector<1x128xf32> to vector<152x128xf32>
    %22 = arith.addf %19, %21 : vector<152x128xf32>
    %23 = arith.truncf %22 : vector<152x128xf32> to vector<152x128xbf16>
    %24 = math.tanh %23 : vector<152x128xbf16>
    %c0_16 = arith.constant 0 : index
    %c0_17 = arith.constant 0 : index
    %25 = vector.load %arg8[%c0_16, %c0_17] : memref<128x256xbf16, #tpu.memory_space<vmem>>, vector<128x256xbf16>
    %cst_18 = arith.constant dense<0.000000e+00> : vector<152x256xf32>
    %26 = tpu.matmul %24, %25, %cst_18 {dimension_numbers = #tpu.dot_dimension_numbers<[1], [0], [0], [1], [0, 0, 1, 1], [], []>} : vector<152x128xbf16>, vector<128x256xbf16>, vector<152x256xf32> -> vector<152x256xf32>
    %c0_19 = arith.constant 0 : index
    %c0_20 = arith.constant 0 : index
    %27 = vector.load %arg9[%c0_19, %c0_20] : memref<1x256xf32, #tpu.memory_space<vmem>>, vector<1x256xf32>
    %28 = vector.broadcast %27 : vector<1x256xf32> to vector<152x256xf32>
    %29 = arith.addf %26, %28 : vector<152x256xf32>
    %30 = arith.truncf %29 : vector<152x256xf32> to vector<152x256xbf16>
    %31 = math.tanh %30 : vector<152x256xbf16>
    %c0_21 = arith.constant 0 : index
    %c0_22 = arith.constant 0 : index
    %32 = vector.load %arg10[%c0_21, %c0_22] : memref<256x64xbf16, #tpu.memory_space<vmem>>, vector<256x64xbf16>
    %cst_23 = arith.constant dense<0.000000e+00> : vector<152x64xf32>
    %33 = tpu.matmul %31, %32, %cst_23 {dimension_numbers = #tpu.dot_dimension_numbers<[1], [0], [0], [1], [0, 0, 1, 1], [], []>} : vector<152x256xbf16>, vector<256x64xbf16>, vector<152x64xf32> -> vector<152x64xf32>
    %c0_24 = arith.constant 0 : index
    %c0_25 = arith.constant 0 : index
    %34 = vector.load %arg11[%c0_24, %c0_25] : memref<1x64xf32, #tpu.memory_space<vmem>>, vector<1x64xf32>
    %35 = vector.broadcast %34 : vector<1x64xf32> to vector<152x64xf32>
    %36 = arith.addf %33, %35 : vector<152x64xf32>
    %c0_26 = arith.constant 0 : index
    %c0_27 = arith.constant 0 : index
    %37 = vector.load %arg12[%c0_26, %c0_27] : memref<152x64xf32, #tpu.memory_space<vmem>>, vector<152x64xf32>
    tpu.vector_store %arg12[%c0_26, %c0_27], %36 {strides = array<i32>} : memref<152x64xf32, #tpu.memory_space<vmem>>, vector<152x64xf32>,
    return
  }
  func.func @transform_0(%arg0: i32) -> (i32, i32) {
    %c0_i32 = arith.constant 0 : i32
    %c0_i32_0 = arith.constant 0 : i32
    return %arg0, %c0_i32 : i32, i32
  }
  func.func @transform_1(%arg0: i32) -> (i32, i32) {
    %c0_i32 = arith.constant 0 : i32
    %c0_i32_0 = arith.constant 0 : i32
    %c0_i32_1 = arith.constant 0 : i32
    return %c0_i32, %c0_i32_0 : i32, i32
  }
  func.func @transform_2(%arg0: i32) -> (i32, i32) {
    %c0_i32 = arith.constant 0 : i32
    %c0_i32_0 = arith.constant 0 : i32
    %c0_i32_1 = arith.constant 0 : i32
    return %c0_i32, %c0_i32_0 : i32, i32
  }
  func.func @transform_3(%arg0: i32) -> (i32, i32) {
    %c0_i32 = arith.constant 0 : i32
    %c0_i32_0 = arith.constant 0 : i32
    %c0_i32_1 = arith.constant 0 : i32
    return %c0_i32, %c0_i32_0 : i32, i32
  }
  func.func @transform_4(%arg0: i32) -> (i32, i32) {
    %c0_i32 = arith.constant 0 : i32
    %c0_i32_0 = arith.constant 0 : i32
    %c0_i32_1 = arith.constant 0 : i32
    return %c0_i32, %c0_i32_0 : i32, i32
  }
  func.func @transform_5(%arg0: i32) -> (i32, i32) {
    %c0_i32 = arith.constant 0 : i32
    %c0_i32_0 = arith.constant 0 : i32
    %c0_i32_1 = arith.constant 0 : i32
    return %c0_i32, %c0_i32_0 : i32, i32
  }
  func.func @transform_6(%arg0: i32) -> (i32, i32) {
    %c0_i32 = arith.constant 0 : i32
    %c0_i32_0 = arith.constant 0 : i32
    %c0_i32_1 = arith.constant 0 : i32
    return %c0_i32, %c0_i32_0 : i32, i32
  }
  func.func @transform_7(%arg0: i32) -> (i32, i32) {
    %c0_i32 = arith.constant 0 : i32
    %c0_i32_0 = arith.constant 0 : i32
    %c0_i32_1 = arith.constant 0 : i32
    return %c0_i32, %c0_i32_0 : i32, i32
  }
  func.func @transform_8(%arg0: i32) -> (i32, i32) {
    %c0_i32 = arith.constant 0 : i32
    %c0_i32_0 = arith.constant 0 : i32
    %c0_i32_1 = arith.constant 0 : i32
    return %c0_i32, %c0_i32_0 : i32, i32
  }
  func.func @transform_9(%arg0: i32) -> (i32, i32) {
    %c0_i32 = arith.constant 0 : i32
    %c0_i32_0 = arith.constant 0 : i32
    %c0_i32_1 = arith.constant 0 : i32
    return %c0_i32, %c0_i32_0 : i32, i32
  }
  func.func @transform_10(%arg0: i32) -> (i32, i32) {
    %c0_i32 = arith.constant 0 : i32
    %c0_i32_0 = arith.constant 0 : i32
    %c0_i32_1 = arith.constant 0 : i32
    return %c0_i32, %c0_i32_0 : i32, i32
  }
  func.func @transform_11(%arg0: i32) -> (i32, i32) {
    %c0_i32 = arith.constant 0 : i32
    %c0_i32_0 = arith.constant 0 : i32
    return %arg0, %c0_i32 : i32, i32
  }
}

</mosaic_0001>

<llo_original>
// kernel: tpu_custom_call.1
$region0: #{tpu_custom_call.1}
  #allocation0 [shape = 'u32[]', space=smem, size = 0x4, offset = 0x4, fixed_abs, tag = 'smem constant byte address 0x4 - core index']
  #allocation1 [shape = 'u32[144,128]{1,0:T(1,128)}', space=vmem, size = 0x12000, scoped, tag = 'internal scratch']
  %s0 = inlined_call_operand.vmem [shape: f32[300,64], index: 0, kind: input, shape index: {}]
  %s1 = inlined_call_operand.vmem [shape: bf16[128,256], index: 1, kind: input, shape index: {}]
  %s2 = inlined_call_operand.vmem [shape: f32[1,256], index: 2, kind: input, shape index: {}]
  %s3 = inlined_call_operand.vmem [shape: bf16[256,128], index: 3, kind: input, shape index: {}]
  %s4 = inlined_call_operand.vmem [shape: f32[1,128], index: 4, kind: input, shape index: {}]
  %s5 = inlined_call_operand.vmem [shape: bf16[128,128], index: 5, kind: input, shape index: {}]
  %s6 = inlined_call_operand.vmem [shape: f32[1,128], index: 6, kind: input, shape index: {}]
  %s7 = inlined_call_operand.vmem [shape: bf16[128,256], index: 7, kind: input, shape index: {}]
  %s8 = inlined_call_operand.vmem [shape: f32[1,256], index: 8, kind: input, shape index: {}]
  %s9 = inlined_call_operand.vmem [shape: bf16[256,64], index: 9, kind: input, shape index: {}]
  %s10 = inlined_call_operand.vmem [shape: f32[1,64], index: 10, kind: input, shape index: {}]
  %s11 = inlined_call_operand.vmem [shape: f32[300,64], index: 11, kind: output, shape index: {}]
  %s12 = sld [smem:[#allocation0]]
  $region77: #{tpu_custom_call.1} parent=0
    _
  %s14 = ssub.s32 1, %s12
  %s15 = scalar_select 0, %s14, %s12
  loop: start=0, step=1, limit=4
  $region2: #{tpu_custom_call.1} parent=0 // loop_pre_header
    _
  $region3: #{tpu_custom_call.1} parent=0 // loop_header
    %s17 = sphi 0, %s21
    %p18 = scmp.ge.s32.totalorder %s17, 4
    %s27 = sphi 0, %s29
    %s30 = sphi 0, %s27
    %s31 = sphi 0, %s30
    %s47 = sphi 0, %s31
    %s51 = sphi 0, %s51
    %s53 = sphi 0, %s51
    %s54 = sphi 0, %s53
    %s68 = sphi 0, %s54
    %s72 = sphi 0, %s72
    %s74 = sphi 0, %s72
    %s75 = sphi 0, %s74
    %s89 = sphi 0, %s75
    %s93 = sphi 0, %s93
    %s95 = sphi 0, %s93
    %s96 = sphi 0, %s95
    %s110 = sphi 0, %s96
    %s114 = sphi 0, %s114
    %s116 = sphi 0, %s114
    %s117 = sphi 0, %s116
    %s131 = sphi 0, %s117
    %s135 = sphi 0, %s135
    %s137 = sphi 0, %s135
    %s138 = sphi 0, %s137
    %s152 = sphi 0, %s138
    %s156 = sphi 0, %s156
    %s158 = sphi 0, %s156
    %s159 = sphi 0, %s158
    %s173 = sphi 0, %s159
    %s177 = sphi 0, %s177
    %s179 = sphi 0, %s177
    %s180 = sphi 0, %s179
    %s194 = sphi 0, %s180
    %s198 = sphi 0, %s198
    %s200 = sphi 0, %s198
    %s201 = sphi 0, %s200
    %s215 = sphi 0, %s201
    %s219 = sphi 0, %s219
    %s221 = sphi 0, %s219
    %s222 = sphi 0, %s221
    %s236 = sphi 0, %s222
    %s240 = sphi 0, %s240
    %s242 = sphi 0, %s240
    %s243 = sphi 0, %s242
    %s257 = sphi 0, %s243
    %s263 = sphi 0, %s265
    %s266 = sphi 0, %s263
    %s267 = sphi 0, %s266
    %s283 = sphi 0, %s267
  $region4: #{tpu_custom_call.1} parent=0 // loop_header_branch
    %20 = sbr.rel (%p18) target = $region8
  $region5: #{tpu_custom_call.1} parent=0 // loop_body
    %s22 = ssub.s32 %s17, 1
    %s23 = ssub.s32 %s17, 2
    %s24 = sadd.s32 %s17, 1
    %s25 = ssub.s32 %s17, %s24
    %p26 = scmp.eq.s32.totalorder %s25, 0
    %s28 = sadd.s32 %s27, 1
    %s29 = scalar_select %p26, %s27, %s28
    %p32 = pneg %p26
    %p33 = scmp.eq.s32.totalorder %s17, 1
    %p34 = por %p32, %p33
    %p35 = scmp.ne.s32.totalorder %s27, %s30
    %p36 = scmp.eq.s32.totalorder %s17, 0
    %p37 = por %p35, %p36
    %p38 = scmp.ne.s32.totalorder %s27, %s30
    %p39 = scmp.eq.s32.totalorder %s22, 1
    %p40 = por %p38, %p39
    %p41 = scmp.ne.s32.totalorder %s30, %s31
    %p42 = scmp.eq.s32.totalorder %s22, 0
    %p43 = por %p41, %p42
    %p44 = scmp.ne.s32.totalorder %s30, %s31
    %p45 = scmp.eq.s32.totalorder %s23, 1
    %p46 = por %p44, %p45
    %p48 = scmp.ne.s32.totalorder %s31, %s47
    %p49 = scmp.eq.s32.totalorder %s23, 0
    %p50 = por %p48, %p49
    %s52 = sadd.s32 %s51, 1
    %p55 = scmp.eq.s32.totalorder %s17, 1
    %p56 = scmp.ne.s32.totalorder %s51, %s53
    %p57 = scmp.eq.s32.totalorder %s17, 0
    %p58 = por %p56, %p57
    %p59 = scmp.ne.s32.totalorder %s51, %s53
    %p60 = scmp.eq.s32.totalorder %s22, 1
    %p61 = por %p59, %p60
    %p62 = scmp.ne.s32.totalorder %s53, %s54
    %p63 = scmp.eq.s32.totalorder %s22, 0
    %p64 = por %p62, %p63
    %p65 = scmp.ne.s32.totalorder %s53, %s54
    %p66 = scmp.eq.s32.totalorder %s23, 1
    %p67 = por %p65, %p66
    %p69 = scmp.ne.s32.totalorder %s54, %s68
    %p70 = scmp.eq.s32.totalorder %s23, 0
    %p71 = por %p69, %p70
    %s73 = sadd.s32 %s72, 1
    %p76 = scmp.eq.s32.totalorder %s17, 1
    %p77 = scmp.ne.s32.totalorder %s72, %s74
    %p78 = scmp.eq.s32.totalorder %s17, 0
    %p79 = por %p77, %p78
    %p80 = scmp.ne.s32.totalorder %s72, %s74
    %p81 = scmp.eq.s32.totalorder %s22, 1
    %p82 = por %p80, %p81
    %p83 = scmp.ne.s32.totalorder %s74, %s75
    %p84 = scmp.eq.s32.totalorder %s22, 0
    %p85 = por %p83, %p84
    %p86 = scmp.ne.s32.totalorder %s74, %s75
    %p87 = scmp.eq.s32.totalorder %s23, 1
    %p88 = por %p86, %p87
    %p90 = scmp.ne.s32.totalorder %s75, %s89
    %p91 = scmp.eq.s32.totalorder %s23, 0
    %p92 = por %p90, %p91
    %s94 = sadd.s32 %s93, 1
    %p97 = scmp.eq.s32.totalorder %s17, 1
    %p98 = scmp.ne.s32.totalorder %s93, %s95
    %p99 = scmp.eq.s32.totalorder %s17, 0
    %p100 = por %p98, %p99
    %p101 = scmp.ne.s32.totalorder %s93, %s95
    %p102 = scmp.eq.s32.totalorder %s22, 1
    %p103 = por %p101, %p102
    %p104 = scmp.ne.s32.totalorder %s95, %s96
    %p105 = scmp.eq.s32.totalorder %s22, 0
    %p106 = por %p104, %p105
    %p107 = scmp.ne.s32.totalorder %s95, %s96
    %p108 = scmp.eq.s32.totalorder %s23, 1
    %p109 = por %p107, %p108
    %p111 = scmp.ne.s32.totalorder %s96, %s110
    %p112 = scmp.eq.s32.totalorder %s23, 0
    %p113 = por %p111, %p112
    %s115 = sadd.s32 %s114, 1
    %p118 = scmp.eq.s32.totalorder %s17, 1
    %p119 = scmp.ne.s32.totalorder %s114, %s116
    %p120 = scmp.eq.s32.totalorder %s17, 0
    %p121 = por %p119, %p120
    %p122 = scmp.ne.s32.totalorder %s114, %s116
    %p123 = scmp.eq.s32.totalorder %s22, 1
    %p124 = por %p122, %p123
    %p125 = scmp.ne.s32.totalorder %s116, %s117
    %p126 = scmp.eq.s32.totalorder %s22, 0
    %p127 = por %p125, %p126
    %p128 = scmp.ne.s32.totalorder %s116, %s117
    %p129 = scmp.eq.s32.totalorder %s23, 1
    %p130 = por %p128, %p129
    %p132 = scmp.ne.s32.totalorder %s117, %s131
    %p133 = scmp.eq.s32.totalorder %s23, 0
    %p134 = por %p132, %p133
    %s136 = sadd.s32 %s135, 1
    %p139 = scmp.eq.s32.totalorder %s17, 1
    %p140 = scmp.ne.s32.totalorder %s135, %s137
    %p141 = scmp.eq.s32.totalorder %s17, 0
    %p142 = por %p140, %p141
    %p143 = scmp.ne.s32.totalorder %s135, %s137
    %p144 = scmp.eq.s32.totalorder %s22, 1
    %p145 = por %p143, %p144
    %p146 = scmp.ne.s32.totalorder %s137, %s138
    %p147 = scmp.eq.s32.totalorder %s22, 0
    %p148 = por %p146, %p147
    %p149 = scmp.ne.s32.totalorder %s137, %s138
    %p150 = scmp.eq.s32.totalorder %s23, 1
    %p151 = por %p149, %p150
    %p153 = scmp.ne.s32.totalorder %s138, %s152
    %p154 = scmp.eq.s32.totalorder %s23, 0
    %p155 = por %p153, %p154
    %s157 = sadd.s32 %s156, 1
    %p160 = scmp.eq.s32.totalorder %s17, 1
    %p161 = scmp.ne.s32.totalorder %s156, %s158
    %p162 = scmp.eq.s32.totalorder %s17, 0
    %p163 = por %p161, %p162
    %p164 = scmp.ne.s32.totalorder %s156, %s158
    %p165 = scmp.eq.s32.totalorder %s22, 1
    %p166 = por %p164, %p165
    %p167 = scmp.ne.s32.totalorder %s158, %s159
    %p168 = scmp.eq.s32.totalorder %s22, 0
    %p169 = por %p167, %p168
    %p170 = scmp.ne.s32.totalorder %s158, %s159
    %p171 = scmp.eq.s32.totalorder %s23, 1
    %p172 = por %p170, %p171
    %p174 = scmp.ne.s32.totalorder %s159, %s173
    %p175 = scmp.eq.s32.totalorder %s23, 0
    %p176 = por %p174, %p175
    %s178 = sadd.s32 %s177, 1
    %p181 = scmp.eq.s32.totalorder %s17, 1
    %p182 = scmp.ne.s32.totalorder %s177, %s179
    %p183 = scmp.eq.s32.totalorder %s17, 0
    %p184 = por %p182, %p183
    %p185 = scmp.ne.s32.totalorder %s177, %s179
    %p186 = scmp.eq.s32.totalorder %s22, 1
    %p187 = por %p185, %p186
    %p188 = scmp.ne.s32.totalorder %s179, %s180
    %p189 = scmp.eq.s32.totalorder %s22, 0
    %p190 = por %p188, %p189
    %p191 = scmp.ne.s32.totalorder %s179, %s180
    %p192 = scmp.eq.s32.totalorder %s23, 1
    %p193 = por %p191, %p192
    %p195 = scmp.ne.s32.totalorder %s180, %s194
    %p196 = scmp.eq.s32.totalorder %s23, 0
    %p197 = por %p195, %p196
    %s199 = sadd.s32 %s198, 1
    %p202 = scmp.eq.s32.totalorder %s17, 1
    %p203 = scmp.ne.s32.totalorder %s198, %s200
    %p204 = scmp.eq.s32.totalorder %s17, 0
    %p205 = por %p203, %p204
    %p206 = scmp.ne.s32.totalorder %s198, %s200
    %p207 = scmp.eq.s32.totalorder %s22, 1
    %p208 = por %p206, %p207
    %p209 = scmp.ne.s32.totalorder %s200, %s201
    %p210 = scmp.eq.s32.totalorder %s22, 0
    %p211 = por %p209, %p210
    %p212 = scmp.ne.s32.totalorder %s200, %s201
    %p213 = scmp.eq.s32.totalorder %s23, 1
    %p214 = por %p212, %p213
    %p216 = scmp.ne.s32.totalorder %s201, %s215
    %p217 = scmp.eq.s32.totalorder %s23, 0
    %p218 = por %p216, %p217
    %s220 = sadd.s32 %s219, 1
    %p223 = scmp.eq.s32.totalorder %s17, 1
    %p224 = scmp.ne.s32.totalorder %s219, %s221
    %p225 = scmp.eq.s32.totalorder %s17, 0
    %p226 = por %p224, %p225
    %p227 = scmp.ne.s32.totalorder %s219, %s221
    %p228 = scmp.eq.s32.totalorder %s22, 1
    %p229 = por %p227, %p228
    %p230 = scmp.ne.s32.totalorder %s221, %s222
    %p231 = scmp.eq.s32.totalorder %s22, 0
    %p232 = por %p230, %p231
    %p233 = scmp.ne.s32.totalorder %s221, %s222
    %p234 = scmp.eq.s32.totalorder %s23, 1
    %p235 = por %p233, %p234
    %p237 = scmp.ne.s32.totalorder %s222, %s236
    %p238 = scmp.eq.s32.totalorder %s23, 0
    %p239 = por %p237, %p238
    %s241 = sadd.s32 %s240, 1
    %p244 = scmp.eq.s32.totalorder %s17, 1
    %p245 = scmp.ne.s32.totalorder %s240, %s242
    %p246 = scmp.eq.s32.totalorder %s17, 0
    %p247 = por %p245, %p246
    %p248 = scmp.ne.s32.totalorder %s240, %s242
    %p249 = scmp.eq.s32.totalorder %s22, 1
    %p250 = por %p248, %p249
    %p251 = scmp.ne.s32.totalorder %s242, %s243
    %p252 = scmp.eq.s32.totalorder %s22, 0
    %p253 = por %p251, %p252
    %p254 = scmp.ne.s32.totalorder %s242, %s243
    %p255 = scmp.eq.s32.totalorder %s23, 1
    %p256 = por %p254, %p255
    %p258 = scmp.ne.s32.totalorder %s243, %s257
    %p259 = scmp.eq.s32.totalorder %s23, 0
    %p260 = por %p258, %p259
    %s261 = ssub.s32 %s17, %s24
    %p262 = scmp.eq.s32.totalorder %s261, 0
    %s264 = sadd.s32 %s263, 1
    %s265 = scalar_select %p262, %s263, %s264
    %p268 = pneg %p262
    %p269 = scmp.eq.s32.totalorder %s17, 1
    %p270 = por %p268, %p269
    %p271 = scmp.ne.s32.totalorder %s263, %s266
    %p272 = scmp.eq.s32.totalorder %s17, 0
    %p273 = por %p271, %p272
    %p274 = scmp.ne.s32.totalorder %s263, %s266
    %p275 = scmp.eq.s32.totalorder %s22, 1
    %p276 = por %p274, %p275
    %p277 = scmp.ne.s32.totalorder %s266, %s267
    %p278 = scmp.eq.s32.totalorder %s22, 0
    %p279 = por %p277, %p278
    %p280 = scmp.ne.s32.totalorder %s266, %s267
    %p281 = scmp.eq.s32.totalorder %s23, 1
    %p282 = por %p280, %p281
    %p284 = scmp.ne.s32.totalorder %s267, %s283
    %p285 = scmp.eq.s32.totalorder %s23, 0
    %p286 = por %p284, %p285
    %p287 = scmp.le.s32.totalorder 1, %s17
    %p288 = scmp.lt.s32.totalorder %s17, 3
    %p289 = pnand %p287, %p288
    %p290 = pneg %p289
    // Predicated region
    $region9: #{tpu_custom_call.1} parent=5 // pred_check
      _
    $region10: #{tpu_custom_call.1} parent=5 // pred_check_branch
      %292 = sbr.rel (%p289) target = $region12
    $region11: #{tpu_custom_call.1} parent=5 // pred_region
      %s293 = ssub.s32 %s17, 1
      // Predicated region
      $region13: #{tpu_custom_call.1} parent=11 // pred_check
        %p294 = pneg %p64
      $region14: #{tpu_custom_call.1} parent=11 // pred_check_branch
        %296 = sbr.rel (%p294) target = $region16
      $region15: #{tpu_custom_call.1} parent=11 // pred_region
        _
      $region16: #{tpu_custom_call.1} parent=11 // pred_fallthru
        _
      // Predicated region
      $region17: #{tpu_custom_call.1} parent=11 // pred_check
        %p297 = pneg %p85
      $region18: #{tpu_custom_call.1} parent=11 // pred_check_branch
        %299 = sbr.rel (%p297) target = $region20
      $region19: #{tpu_custom_call.1} parent=11 // pred_region
        _
      $region20: #{tpu_custom_call.1} parent=11 // pred_fallthru
        _
      // Predicated region
      $region21: #{tpu_custom_call.1} parent=11 // pred_check
        %p300 = pneg %p106
      $region22: #{tpu_custom_call.1} parent=11 // pred_check_branch
        %302 = sbr.rel (%p300) target = $region24
      $region23: #{tpu_custom_call.1} parent=11 // pred_region
        _
      $region24: #{tpu_custom_call.1} parent=11 // pred_fallthru
        _
      // Predicated region
      $region25: #{tpu_custom_call.1} parent=11 // pred_check
        %p303 = pneg %p127
      $region26: #{tpu_custom_call.1} parent=11 // pred_check_branch
        %305 = sbr.rel (%p303) target = $region28
      $region27: #{tpu_custom_call.1} parent=11 // pred_region
        _
      $region28: #{tpu_custom_call.1} parent=11 // pred_fallthru
        _
      // Predicated region
      $region29: #{tpu_custom_call.1} parent=11 // pred_check
        %p306 = pneg %p148
      $region30: #{tpu_custom_call.1} parent=11 // pred_check_branch
        %308 = sbr.rel (%p306) target = $region32
      $region31: #{tpu_custom_call.1} parent=11 // pred_region
        _
      $region32: #{tpu_custom_call.1} parent=11 // pred_fallthru
        _
      // Predicated region
      $region33: #{tpu_custom_call.1} parent=11 // pred_check
        %p309 = pneg %p169
      $region34: #{tpu_custom_call.1} parent=11 // pred_check_branch
        %311 = sbr.rel (%p309) target = $region36
      $region35: #{tpu_custom_call.1} parent=11 // pred_region
        _
      $region36: #{tpu_custom_call.1} parent=11 // pred_fallthru
        _
      // Predicated region
      $region37: #{tpu_custom_call.1} parent=11 // pred_check
        %p312 = pneg %p190
      $region38: #{tpu_custom_call.1} parent=11 // pred_check_branch
        %314 = sbr.rel (%p312) target = $region40
      $region39: #{tpu_custom_call.1} parent=11 // pred_region
        _
      $region40: #{tpu_custom_call.1} parent=11 // pred_fallthru
        _
      // Predicated region
      $region41: #{tpu_custom_call.1} parent=11 // pred_check
        %p315 = pneg %p211
      $region42: #{tpu_custom_call.1} parent=11 // pred_check_branch
        %317 = sbr.rel (%p315) target = $region44
      $region43: #{tpu_custom_call.1} parent=11 // pred_region
        _
      $region44: #{tpu_custom_call.1} parent=11 // pred_fallthru
        _
      // Predicated region
      $region45: #{tpu_custom_call.1} parent=11 // pred_check
        %p318 = pneg %p232
      $region46: #{tpu_custom_call.1} parent=11 // pred_check_branch
        %320 = sbr.rel (%p318) target = $region48
      $region47: #{tpu_custom_call.1} parent=11 // pred_region
        _
      $region48: #{tpu_custom_call.1} parent=11 // pred_fallthru
        _
      // Predicated region
      $region49: #{tpu_custom_call.1} parent=11 // pred_check
        %p321 = pneg %p253
      $region50: #{tpu_custom_call.1} parent=11 // pred_check_branch
        %323 = sbr.rel (%p321) target = $region52
      $region51: #{tpu_custom_call.1} parent=11 // pred_region
        _
      $region52: #{tpu_custom_call.1} parent=11 // pred_fallthru
        _
    $region12: #{tpu_custom_call.1} parent=5 // pred_fallthru
      _
    %p324 = scmp.lt.s32.totalorder %s17, 2
    // Predicated region
    $region53: #{tpu_custom_call.1} parent=5 // pred_check
      %p325 = pneg %p324
    $region54: #{tpu_custom_call.1} parent=5 // pred_check_branch
      %327 = sbr.rel (%p325) target = $region56
    $region55: #{tpu_custom_call.1} parent=5 // pred_region
      // Predicated region
      $region57: #{tpu_custom_call.1} parent=55 // pred_check
        %p328 = pneg %p37
      $region58: #{tpu_custom_call.1} parent=55 // pred_check_branch
        %330 = sbr.rel (%p328) target = $region60
      $region59: #{tpu_custom_call.1} parent=55 // pred_region
        %s331 = smul.u32 19, %s17
        %p332 = scmp.lt.s32.totalorder %s331, 37
        %s333 = scalar_select %p332, %s331, 37
        %s334 = smul.addr %s333, 8
        %s335 = scalar_lea.vmem %s0, %s334
        %s336 = smul.u32 19, %s17
      $region60: #{tpu_custom_call.1} parent=55 // pred_fallthru
        _
    $region56: #{tpu_custom_call.1} parent=5 // pred_fallthru
      _
    %p337 = scmp.le.s32.totalorder 1, %s17
    %p338 = scmp.lt.s32.totalorder %s17, 3
    %p339 = pnand %p337, %p338
    %p340 = pneg %p339
    // Predicated region
    $region61: #{tpu_custom_call.1} parent=5 // pred_check
      _
    $region62: #{tpu_custom_call.1} parent=5 // pred_check_branch
      %342 = sbr.rel (%p339) target = $region64
    $region63: #{tpu_custom_call.1} parent=5 // pred_region
      %s343 = ssub.s32 %s17, 1
      %s344 = smul.u32 19, %s22
      %p345 = scmp.lt.s32.totalorder %s344, 37
      %s346 = scalar_select %p345, %s344, 37
      %s347 = smul.addr %s346, 8
      %s348 = scalar_lea.vmem %s0, %s347
      %p349 = pneg %p43
      %p350 = pneg %p40
      %p351 = pneg %p64
      %p352 = pneg %p61
      %p353 = pneg %p85
      %p354 = pneg %p82
      %p355 = pneg %p106
      %p356 = pneg %p103
      %p357 = pneg %p127
      %p358 = pneg %p124
      %p359 = pneg %p148
      %p360 = pneg %p145
      %p361 = pneg %p169
      %p362 = pneg %p166
      %p363 = pneg %p190
      %p364 = pneg %p187
      %p365 = pneg %p211
      %p366 = pneg %p208
      %p367 = pneg %p232
      %p368 = pneg %p229
      %p369 = pneg %p253
      %p370 = pneg %p250
      %p371 = pneg %p279
      %p372 = pneg %p276
      %s373 = smul.u32 19, %s22
      %p374 = scmp.lt.s32.totalorder %s373, 37
      %s375 = scalar_select %p374, %s373, 37
      %s376 = smul.addr %s375, 8
      %s377 = scalar_lea.vmem %s11, %s376
      %s378 = smul.u32 19, %s22
      %p379 = scmp.lt.s32.totalorder %s378, 37
      %s380 = scalar_select %p379, %s378, 37
      %s381 = smul.addr %s380, 8
      %s382 = scalar_lea.vmem %s0, %s381
      %s383 = smul.u32 19, %s22
      %s384 = smul.u32 19, %s22
      %p385 = scmp.lt.s32.totalorder %s384, 37
      %s386 = scalar_select %p385, %s384, 37
      %s387 = smul.addr %s386, 8
      %s388 = scalar_lea.vmem %s11, %s387
      %s389 = smul.u32 19, %s22
      %v391 = vld [vmem:[%s382] sm:$0xff]
      %v392 = vld [vmem:[%s382 + $0x8] sm:$0xff]
      %v393 = vld [vmem:[%s382 + $0x10] sm:$0xff]
      %v394 = vld [vmem:[%s382 + $0x18] sm:$0xff]
      %v395 = vld [vmem:[%s382 + $0x20] sm:$0xff]
      %v396 = vld [vmem:[%s382 + $0x28] sm:$0xff]
      %v397 = vld [vmem:[%s382 + $0x30] sm:$0xff]
      %v398 = vld [vmem:[%s382 + $0x38] sm:$0xff]
      %v399 = vld [vmem:[%s382 + $0x40] sm:$0xff]
      %v400 = vld [vmem:[%s382 + $0x48] sm:$0xff]
      %v401 = vld [vmem:[%s382 + $0x50] sm:$0xff]
      %v402 = vld [vmem:[%s382 + $0x58] sm:$0xff]
      %v403 = vld [vmem:[%s382 + $0x60] sm:$0xff]
      %v404 = vld [vmem:[%s382 + $0x68] sm:$0xff]
      %v405 = vld [vmem:[%s382 + $0x70] sm:$0xff]
      %v406 = vld [vmem:[%s382 + $0x78] sm:$0xff]
      %v407 = vld [vmem:[%s382 + $0x80] sm:$0xff]
      %v408 = vld [vmem:[%s382 + $0x88] sm:$0xff]
      %v409 = vld [vmem:[%s382 + $0x90] sm:$0xff]
      %v410 = vpack.c.bf16 %v392, %v391
      %v411 = vpack.c.bf16 %v394, %v393
      %v412 = vpack.c.bf16 %v396, %v395
      %v413 = vpack.c.bf16 %v398, %v397
      %v414 = vpack.c.bf16 %v400, %v399
      %v415 = vpack.c.bf16 %v402, %v401
      %v416 = vpack.c.bf16 %v404, %v403
      %v417 = vpack.c.bf16 %v406, %v405
      %v418 = vpack.c.bf16 %v408, %v407
      %v419 = vpack.c.bf16 %v409, %v409
      %vm420 = vcmask 523264
      %v423 = vsel %vm420, %v410, 0
      %v426 = vsel %vm420, %v411, 0
      %v429 = vsel %vm420, %v412, 0
      %v432 = vsel %vm420, %v413, 0
      %v435 = vsel %vm420, %v414, 0
      %v438 = vsel %vm420, %v415, 0
      %v441 = vsel %vm420, %v416, 0
      %v444 = vsel %vm420, %v417, 0
      %v447 = vsel %vm420, %v418, 0
      %v450 = vsel %vm420, %v419, 0
      %v452 = vld [vmem:[%s1] sm:$0xff]
      %v453 = vld [vmem:[%s1 + $0x8] sm:$0xff]
      %v454 = vld [vmem:[%s1 + $0x10] sm:$0xff]
      %v455 = vld [vmem:[%s1 + $0x18] sm:$0xff]
      %v456 = vld [vmem:[%s1 + $0x20] sm:$0xff]
      %v457 = vld [vmem:[%s1 + $0x28] sm:$0xff]
      %v458 = vld [vmem:[%s1 + $0x30] sm:$0xff]
      %v459 = vld [vmem:[%s1 + $0x38] sm:$0xff]
      %v460 = vld [vmem:[%s1 + $0x40] sm:$0xff]
      %v461 = vld [vmem:[%s1 + $0x48] sm:$0xff]
      %v462 = vld [vmem:[%s1 + $0x50] sm:$0xff]
      %v463 = vld [vmem:[%s1 + $0x58] sm:$0xff]
      %v464 = vld [vmem:[%s1 + $0x60] sm:$0xff]
      %v465 = vld [vmem:[%s1 + $0x68] sm:$0xff]
      %v466 = vld [vmem:[%s1 + $0x70] sm:$0xff]
      %v467 = vld [vmem:[%s1 + $0x78] sm:$0xff]
      %v468 = vld [vmem:[%s2] sm:$0x3]
      %v470 = vlaneseq
      %v471 = vshrl.u32 %v470, 7
      %v472 = vsub.s32 0, %v471
      %v473 = vrot.slane %v468, %v472
      %v474 = vlaneseq
      %v475 = vshrl.u32 %v474, 7
      %v476 = vsub.s32 1, %v475
      %v477 = vrot.slane %v468, %v476
      %v496 = vunpack.c.l.b16 %v452
      %v497 = vunpack.c.h.b16 %v452
      %v498 = vunpack.c.l.b16 %v453
      %v499 = vunpack.c.h.b16 %v453
      %v500 = vunpack.c.l.b16 %v454
      %v501 = vunpack.c.h.b16 %v454
      %v502 = vunpack.c.l.b16 %v455
      %v503 = vunpack.c.h.b16 %v455
      %v504 = vunpack.c.l.b16 %v456
      %v505 = vunpack.c.h.b16 %v456
      %v506 = vunpack.c.l.b16 %v457
      %v507 = vunpack.c.h.b16 %v457
      %v508 = vunpack.c.l.b16 %v458
      %v509 = vunpack.c.h.b16 %v458
      %v510 = vunpack.c.l.b16 %v459
      %v511 = vunpack.c.h.b16 %v459
      %v512 = vunpack.c.l.b16 %v460
      %v513 = vunpack.c.h.b16 %v460
      %v514 = vunpack.c.l.b16 %v461
      %v515 = vunpack.c.h.b16 %v461
      %v516 = vunpack.c.l.b16 %v462
      %v517 = vunpack.c.h.b16 %v462
      %v518 = vunpack.c.l.b16 %v463
      %v519 = vunpack.c.h.b16 %v463
      %v520 = vunpack.c.l.b16 %v464
      %v521 = vunpack.c.h.b16 %v464
      %v522 = vunpack.c.l.b16 %v465
      %v523 = vunpack.c.h.b16 %v465
      %v524 = vunpack.c.l.b16 %v466
      %v525 = vunpack.c.h.b16 %v466
      %v526 = vunpack.c.l.b16 %v467
      %v527 = vunpack.c.h.b16 %v467
      %v528 = vpack.c.b16 %v498, %v496
      %v529 = vpack.c.b16 %v499, %v497
      %v530 = vpack.c.b16 %v502, %v500
      %v531 = vpack.c.b16 %v503, %v501
      %v532 = vpack.c.b16 %v506, %v504
      %v533 = vpack.c.b16 %v507, %v505
      %v534 = vpack.c.b16 %v510, %v508
      %v535 = vpack.c.b16 %v511, %v509
      %v536 = vpack.c.b16 %v514, %v512
      %v537 = vpack.c.b16 %v515, %v513
      %v538 = vpack.c.b16 %v518, %v516
      %v539 = vpack.c.b16 %v519, %v517
      %v540 = vpack.c.b16 %v522, %v520
      %v541 = vpack.c.b16 %v523, %v521
      %v542 = vpack.c.b16 %v526, %v524
      %v543 = vpack.c.b16 %v527, %v525
      %560 = vmatprep.subr.bf16.mxu0 %v529
      %561 = vmatpush1.bf16.msra.mxu0 %v528
      %562 = vmatprep.subr.bf16.mxu0 %v531
      %563 = vmatpush1.bf16.msra.mxu0 %v530
      %564 = vmatprep.subr.bf16.mxu0 %v533
      %565 = vmatpush1.bf16.msra.mxu0 %v532
      %566 = vmatprep.subr.bf16.mxu0 %v535
      %567 = vmatpush1.bf16.msra.mxu0 %v534
      %568 = vmatprep.subr.bf16.mxu0 %v537
      %569 = vmatpush1.bf16.msra.mxu0 %v536
      %570 = vmatprep.subr.bf16.mxu0 %v539
      %571 = vmatpush1.bf16.msra.mxu0 %v538
      %572 = vmatprep.subr.bf16.mxu0 %v541
      %573 = vmatpush1.bf16.msra.mxu0 %v540
      %574 = vmatprep.subr.bf16.mxu0 %v543
      %575 = vmatpush1.bf16.msra.mxu0 %v542
      %576 = vmatprep.subr.bf16.mxu0 0
      %577 = vmatpush1.bf16.msra.mxu0 0
      %578 = vmatprep.subr.bf16.mxu0 0
      %579 = vmatpush1.bf16.msra.mxu0 0
      %580 = vmatprep.subr.bf16.mxu0 0
      %581 = vmatpush1.bf16.msra.mxu0 0
      %582 = vmatprep.subr.bf16.mxu0 0
      %583 = vmatpush1.bf16.msra.mxu0 0
      %584 = vmatprep.subr.bf16.mxu0 0
      %585 = vmatpush1.bf16.msra.mxu0 0
      %586 = vmatprep.subr.bf16.mxu0 0
      %587 = vmatpush1.bf16.msra.mxu0 0
      %588 = vmatprep.subr.bf16.mxu0 0
      %589 = vmatpush1.bf16.msra.mxu0 0
      %590 = vmatprep.subr.bf16.mxu0 0
      %591 = vmatpush1.bf16.msra.mxu0 0
      %592 = vmatprep.mubr.bf16.mxu0 0
      %593 = vmatmul.mubr.bf16.gmra.mrb[0].mxu0 %v423
      %v594 = vpop.f32.mrb[0].mxu0
      %v595 = vadd.f32 %v473, %v594
      %v596 = vpop.f32.mrb[0].mxu0
      %v597 = vadd.f32 %v477, %v596
      %v598 = vpop.f32.mrb[0].mxu0
      %v599 = vadd.f32 %v473, %v598
      %v600 = vpop.f32.mrb[0].mxu0
      %v601 = vadd.f32 %v477, %v600
      %602 = vmatprep.mubr.bf16.mxu0 0
      %603 = vmatmul.mubr.bf16.gmra.mrb[0].mxu0 %v426
      %v604 = vpop.f32.mrb[0].mxu0
      %v605 = vadd.f32 %v473, %v604
      %v606 = vpop.f32.mrb[0].mxu0
      %v607 = vadd.f32 %v477, %v606
      %v608 = vpop.f32.mrb[0].mxu0
      %v609 = vadd.f32 %v473, %v608
      %v610 = vpop.f32.mrb[0].mxu0
      %v611 = vadd.f32 %v477, %v610
      %612 = vmatprep.mubr.bf16.mxu0 0
      %613 = vmatmul.mubr.bf16.gmra.mrb[0].mxu0 %v429
      %v614 = vpop.f32.mrb[0].mxu0
      %v615 = vadd.f32 %v473, %v614
      %v616 = vpop.f32.mrb[0].mxu0
      %v617 = vadd.f32 %v477, %v616
      %v618 = vpop.f32.mrb[0].mxu0
      %v619 = vadd.f32 %v473, %v618
      %v620 = vpop.f32.mrb[0].mxu0
      %v621 = vadd.f32 %v477, %v620
      %622 = vmatprep.mubr.bf16.mxu0 0
      %623 = vmatmul.mubr.bf16.gmra.mrb[0].mxu0 %v432
      %v624 = vpop.f32.mrb[0].mxu0
      %v625 = vadd.f32 %v473, %v624
      %v626 = vpop.f32.mrb[0].mxu0
      %v627 = vadd.f32 %v477, %v626
      %v628 = vpop.f32.mrb[0].mxu0
      %v629 = vadd.f32 %v473, %v628
      %v630 = vpop.f32.mrb[0].mxu0
      %v631 = vadd.f32 %v477, %v630
      %632 = vmatprep.mubr.bf16.mxu0 0
      %633 = vmatmul.mubr.bf16.gmra.mrb[0].mxu0 %v435
      %v634 = vpop.f32.mrb[0].mxu0
      %v635 = vadd.f32 %v473, %v634
      %v636 = vpop.f32.mrb[0].mxu0
      %v637 = vadd.f32 %v477, %v636
      %v638 = vpop.f32.mrb[0].mxu0
      %v639 = vadd.f32 %v473, %v638
      %v640 = vpop.f32.mrb[0].mxu0
      %v641 = vadd.f32 %v477, %v640
      %642 = vmatprep.mubr.bf16.mxu0 0
      %643 = vmatmul.mubr.bf16.gmra.mrb[0].mxu0 %v438
      %v644 = vpop.f32.mrb[0].mxu0
      %v645 = vadd.f32 %v473, %v644
      %v646 = vpop.f32.mrb[0].mxu0
      %v647 = vadd.f32 %v477, %v646
      %v648 = vpop.f32.mrb[0].mxu0
      %v649 = vadd.f32 %v473, %v648
      %v650 = vpop.f32.mrb[0].mxu0
      %v651 = vadd.f32 %v477, %v650
      %652 = vmatprep.mubr.bf16.mxu0 0
      %653 = vmatmul.mubr.bf16.gmra.mrb[0].mxu0 %v441
      %v654 = vpop.f32.mrb[0].mxu0
      %v655 = vadd.f32 %v473, %v654
      %v656 = vpop.f32.mrb[0].mxu0
      %v657 = vadd.f32 %v477, %v656
      %v658 = vpop.f32.mrb[0].mxu0
      %v659 = vadd.f32 %v473, %v658
      %v660 = vpop.f32.mrb[0].mxu0
      %v661 = vadd.f32 %v477, %v660
      %662 = vmatprep.mubr.bf16.mxu0 0
      %663 = vmatmul.mubr.bf16.gmra.mrb[0].mxu0 %v444
      %v664 = vpop.f32.mrb[0].mxu0
      %v665 = vadd.f32 %v473, %v664
      %v666 = vpop.f32.mrb[0].mxu0
      %v667 = vadd.f32 %v477, %v666
      %v668 = vpop.f32.mrb[0].mxu0
      %v669 = vadd.f32 %v473, %v668
      %v670 = vpop.f32.mrb[0].mxu0
      %v671 = vadd.f32 %v477, %v670
      %672 = vmatprep.mubr.bf16.mxu0 0
      %673 = vmatmul.mubr.bf16.gmra.mrb[0].mxu0 %v447
      %v674 = vpop.f32.mrb[0].mxu0
      %v675 = vadd.f32 %v473, %v674
      %v676 = vpop.f32.mrb[0].mxu0
      %v677 = vadd.f32 %v477, %v676
      %v678 = vpop.f32.mrb[0].mxu0
      %v679 = vadd.f32 %v473, %v678
      %v680 = vpop.f32.mrb[0].mxu0
      %v681 = vadd.f32 %v477, %v680
      %682 = vmatprep.mubr.bf16.mxu0 0
      %683 = vmatmul.mubr.bf16.gmra.mrb[0].mxu0 %v450
      %v684 = vpop.f32.mrb[0].mxu0
      %v685 = vadd.f32 %v473, %v684
      %v686 = vpop.f32.mrb[0].mxu0
      %v687 = vadd.f32 %v477, %v686
      %v688 = vpop.f32.mrb[0].mxu0
      %v689 = vpop.f32.mrb[0].mxu0
      %690 = vdwg.mxu0
      %v691 = vpack.c.bf16 %v599, %v595
      %v692 = vpack.c.bf16 %v601, %v597
      %v693 = vpack.c.bf16 %v609, %v605
      %v694 = vpack.c.bf16 %v611, %v607
      %v695 = vpack.c.bf16 %v619, %v615
      %v696 = vpack.c.bf16 %v621, %v617
      %v697 = vpack.c.bf16 %v629, %v625
      %v698 = vpack.c.bf16 %v631, %v627
      %v699 = vpack.c.bf16 %v639, %v635
      %v700 = vpack.c.bf16 %v641, %v637
      %v701 = vpack.c.bf16 %v649, %v645
      %v702 = vpack.c.bf16 %v651, %v647
      %v703 = vpack.c.bf16 %v659, %v655
      %v704 = vpack.c.bf16 %v661, %v657
      %v705 = vpack.c.bf16 %v669, %v665
      %v706 = vpack.c.bf16 %v671, %v667
      %v707 = vpack.c.bf16 %v679, %v675
      %v708 = vpack.c.bf16 %v681, %v677
      %v709 = vpack.c.bf16 %v685, %v685
      %v710 = vpack.c.bf16 %v687, %v687
      %v711 = vtanh.bf16.pop %v691
      %v712 = vtanh.bf16.pop %v692
      %v713 = vtanh.bf16.pop %v693
      %v714 = vtanh.bf16.pop %v694
      %v715 = vtanh.bf16.pop %v695
      %v716 = vtanh.bf16.pop %v696
      %v717 = vtanh.bf16.pop %v697
      %v718 = vtanh.bf16.pop %v698
      %v719 = vtanh.bf16.pop %v699
      %v720 = vtanh.bf16.pop %v700
      %v721 = vtanh.bf16.pop %v701
      %v722 = vtanh.bf16.pop %v702
      %v723 = vtanh.bf16.pop %v703
      %v724 = vtanh.bf16.pop %v704
      %v725 = vtanh.bf16.pop %v705
      %v726 = vtanh.bf16.pop %v706
      %v727 = vtanh.bf16.pop %v707
      %v728 = vtanh.bf16.pop %v708
      %v729 = vtanh.bf16.pop %v709
      %v730 = vtanh.bf16.pop %v710
      %v731 = vld [vmem:[%s3] sm:$0xf]
      %v732 = vld [vmem:[%s3 + $0x4] sm:$0xf]
      %v733 = vld [vmem:[%s3 + $0x8] sm:$0xf]
      %v734 = vld [vmem:[%s3 + $0xc] sm:$0xf]
      %v735 = vld [vmem:[%s3 + $0x10] sm:$0xf]
      %v736 = vld [vmem:[%s3 + $0x14] sm:$0xf]
      %v737 = vld [vmem:[%s3 + $0x18] sm:$0xf]
      %v738 = vld [vmem:[%s3 + $0x1c] sm:$0xf]
      %v739 = vld [vmem:[%s3 + $0x20] sm:$0xf]
      %v740 = vld [vmem:[%s3 + $0x24] sm:$0xf]
      %v741 = vld [vmem:[%s3 + $0x28] sm:$0xf]
      %v742 = vld [vmem:[%s3 + $0x2c] sm:$0xf]
      %v743 = vld [vmem:[%s3 + $0x30] sm:$0xf]
      %v744 = vld [vmem:[%s3 + $0x34] sm:$0xf]
      %v745 = vld [vmem:[%s3 + $0x38] sm:$0xf]
      %v746 = vld [vmem:[%s3 + $0x3c] sm:$0xf]
      %v747 = vld [vmem:[%s3 + $0x40] sm:$0xf]
      %v748 = vld [vmem:[%s3 + $0x44] sm:$0xf]
      %v749 = vld [vmem:[%s3 + $0x48] sm:$0xf]
      %v750 = vld [vmem:[%s3 + $0x4c] sm:$0xf]
      %v751 = vld [vmem:[%s3 + $0x50] sm:$0xf]
      %v752 = vld [vmem:[%s3 + $0x54] sm:$0xf]
      %v753 = vld [vmem:[%s3 + $0x58] sm:$0xf]
      %v754 = vld [vmem:[%s3 + $0x5c] sm:$0xf]
      %v755 = vld [vmem:[%s3 + $0x60] sm:$0xf]
      %v756 = vld [vmem:[%s3 + $0x64] sm:$0xf]
      %v757 = vld [vmem:[%s3 + $0x68] sm:$0xf]
      %v758 = vld [vmem:[%s3 + $0x6c] sm:$0xf]
      %v759 = vld [vmem:[%s3 + $0x70] sm:$0xf]
      %v760 = vld [vmem:[%s3 + $0x74] sm:$0xf]
      %v761 = vld [vmem:[%s3 + $0x78] sm:$0xf]
      %v762 = vld [vmem:[%s3 + $0x7c] sm:$0xf]
      %v763 = vld [vmem:[%s4] sm:$0x1]
      %v765 = vlaneseq
      %v766 = vshrl.u32 %v765, 7
      %v767 = vsub.s32 0, %v766
      %v768 = vrot.slane %v763, %v767
      %v802 = vunpack.c.l.b16 %v731
      %v803 = vunpack.c.l.b16 %v732
      %v804 = vunpack.c.l.b16 %v733
      %v805 = vunpack.c.l.b16 %v734
      %v806 = vunpack.c.l.b16 %v735
      %v807 = vunpack.c.l.b16 %v736
      %v808 = vunpack.c.l.b16 %v737
      %v809 = vunpack.c.l.b16 %v738
      %v810 = vunpack.c.l.b16 %v739
      %v811 = vunpack.c.l.b16 %v740
      %v812 = vunpack.c.l.b16 %v741
      %v813 = vunpack.c.l.b16 %v742
      %v814 = vunpack.c.l.b16 %v743
      %v815 = vunpack.c.l.b16 %v744
      %v816 = vunpack.c.l.b16 %v745
      %v817 = vunpack.c.l.b16 %v746
      %v818 = vunpack.c.l.b16 %v747
      %v819 = vunpack.c.l.b16 %v748
      %v820 = vunpack.c.l.b16 %v749
      %v821 = vunpack.c.l.b16 %v750
      %v822 = vunpack.c.l.b16 %v751
      %v823 = vunpack.c.l.b16 %v752
      %v824 = vunpack.c.l.b16 %v753
      %v825 = vunpack.c.l.b16 %v754
      %v826 = vunpack.c.l.b16 %v755
      %v827 = vunpack.c.l.b16 %v756
      %v828 = vunpack.c.l.b16 %v757
      %v829 = vunpack.c.l.b16 %v758
      %v830 = vunpack.c.l.b16 %v759
      %v831 = vunpack.c.l.b16 %v760
      %v832 = vunpack.c.l.b16 %v761
      %v833 = vunpack.c.l.b16 %v762
      %v834 = vpack.c.b16 %v803, %v802
      %v835 = vpack.c.b16 %v805, %v804
      %v836 = vpack.c.b16 %v807, %v806
      %v837 = vpack.c.b16 %v809, %v808
      %v838 = vpack.c.b16 %v811, %v810
      %v839 = vpack.c.b16 %v813, %v812
      %v840 = vpack.c.b16 %v815, %v814
      %v841 = vpack.c.b16 %v817, %v816
      %v842 = vpack.c.b16 %v819, %v818
      %v843 = vpack.c.b16 %v821, %v820
      %v844 = vpack.c.b16 %v823, %v822
      %v845 = vpack.c.b16 %v825, %v824
      %v846 = vpack.c.b16 %v827, %v826
      %v847 = vpack.c.b16 %v829, %v828
      %v848 = vpack.c.b16 %v831, %v830
      %v849 = vpack.c.b16 %v833, %v832
      %866 = vmatprep.subr.bf16.mxu0 0
      %867 = vmatpush1.bf16.msra.mxu0 %v834
      %868 = vmatprep.subr.bf16.mxu0 0
      %869 = vmatpush1.bf16.msra.mxu0 %v835
      %870 = vmatprep.subr.bf16.mxu0 0
      %871 = vmatpush1.bf16.msra.mxu0 %v836
      %872 = vmatprep.subr.bf16.mxu0 0
      %873 = vmatpush1.bf16.msra.mxu0 %v837
      %874 = vmatprep.subr.bf16.mxu0 0
      %875 = vmatpush1.bf16.msra.mxu0 %v838
      %876 = vmatprep.subr.bf16.mxu0 0
      %877 = vmatpush1.bf16.msra.mxu0 %v839
      %878 = vmatprep.subr.bf16.mxu0 0
      %879 = vmatpush1.bf16.msra.mxu0 %v840
      %880 = vmatprep.subr.bf16.mxu0 0
      %881 = vmatpush1.bf16.msra.mxu0 %v841
      %882 = vmatprep.subr.bf16.mxu0 0
      %883 = vmatpush1.bf16.msra.mxu0 %v842
      %884 = vmatprep.subr.bf16.mxu0 0
      %885 = vmatpush1.bf16.msra.mxu0 %v843
      %886 = vmatprep.subr.bf16.mxu0 0
      %887 = vmatpush1.bf16.msra.mxu0 %v844
      %888 = vmatprep.subr.bf16.mxu0 0
      %889 = vmatpush1.bf16.msra.mxu0 %v845
      %890 = vmatprep.subr.bf16.mxu0 0
      %891 = vmatpush1.bf16.msra.mxu0 %v846
      %892 = vmatprep.subr.bf16.mxu0 0
      %893 = vmatpush1.bf16.msra.mxu0 %v847
      %894 = vmatprep.subr.bf16.mxu0 0
      %895 = vmatpush1.bf16.msra.mxu0 %v848
      %896 = vmatprep.subr.bf16.mxu0 0
      %897 = vmatpush1.bf16.msra.mxu0 %v849
      %898 = vmatprep.mubr.bf16.mxu0 %v712
      %899 = vmatmul.mubr.bf16.gmra.mrb[0].mxu0 %v711
      %v900 = vpop.f32.mrb[0].mxu0
      %v901 = vadd.f32 %v768, %v900
      %v902 = vpop.f32.mrb[0].mxu0
      %v903 = vpop.f32.mrb[0].mxu0
      %v904 = vadd.f32 %v768, %v903
      %v905 = vpop.f32.mrb[0].mxu0
      %906 = vmatprep.mubr.bf16.mxu0 %v714
      %907 = vmatmul.mubr.bf16.gmra.mrb[0].mxu0 %v713
      %v908 = vpop.f32.mrb[0].mxu0
      %v909 = vadd.f32 %v768, %v908
      %v910 = vpop.f32.mrb[0].mxu0
      %v911 = vpop.f32.mrb[0].mxu0
      %v912 = vadd.f32 %v768, %v911
      %v913 = vpop.f32.mrb[0].mxu0
      %914 = vmatprep.mubr.bf16.mxu0 %v716
      %915 = vmatmul.mubr.bf16.gmra.mrb[0].mxu0 %v715
      %v916 = vpop.f32.mrb[0].mxu0
      %v917 = vadd.f32 %v768, %v916
      %v918 = vpop.f32.mrb[0].mxu0
      %v919 = vpop.f32.mrb[0].mxu0
      %v920 = vadd.f32 %v768, %v919
      %v921 = vpop.f32.mrb[0].mxu0
      %922 = vmatprep.mubr.bf16.mxu0 %v718
      %923 = vmatmul.mubr.bf16.gmra.mrb[0].mxu0 %v717
      %v924 = vpop.f32.mrb[0].mxu0
      %v925 = vadd.f32 %v768, %v924
      %v926 = vpop.f32.mrb[0].mxu0
      %v927 = vpop.f32.mrb[0].mxu0
      %v928 = vadd.f32 %v768, %v927
      %v929 = vpop.f32.mrb[0].mxu0
      %930 = vmatprep.mubr.bf16.mxu0 %v720
      %931 = vmatmul.mubr.bf16.gmra.mrb[0].mxu0 %v719
      %v932 = vpop.f32.mrb[0].mxu0
      %v933 = vadd.f32 %v768, %v932
      %v934 = vpop.f32.mrb[0].mxu0
      %v935 = vpop.f32.mrb[0].mxu0
      %v936 = vadd.f32 %v768, %v935
      %v937 = vpop.f32.mrb[0].mxu0
      %938 = vmatprep.mubr.bf16.mxu0 %v722
      %939 = vmatmul.mubr.bf16.gmra.mrb[0].mxu0 %v721
      %v940 = vpop.f32.mrb[0].mxu0
      %v941 = vadd.f32 %v768, %v940
      %v942 = vpop.f32.mrb[0].mxu0
      %v943 = vpop.f32.mrb[0].mxu0
      %v944 = vadd.f32 %v768, %v943
      %v945 = vpop.f32.mrb[0].mxu0
      %946 = vmatprep.mubr.bf16.mxu0 %v724
      %947 = vmatmul.mubr.bf16.gmra.mrb[0].mxu0 %v723
      %v948 = vpop.f32.mrb[0].mxu0
      %v949 = vadd.f32 %v768, %v948
      %v950 = vpop.f32.mrb[0].mxu0
      %v951 = vpop.f32.mrb[0].mxu0
      %v952 = vadd.f32 %v768, %v951
      %v953 = vpop.f32.mrb[0].mxu0
      %954 = vmatprep.mubr.bf16.mxu0 %v726
      %955 = vmatmul.mubr.bf16.gmra.mrb[0].mxu0 %v725
      %v956 = vpop.f32.mrb[0].mxu0
      %v957 = vadd.f32 %v768, %v956
      %v958 = vpop.f32.mrb[0].mxu0
      %v959 = vpop.f32.mrb[0].mxu0
      %v960 = vadd.f32 %v768, %v959
      %v961 = vpop.f32.mrb[0].mxu0
      %962 = vmatprep.mubr.bf16.mxu0 %v728
      %963 = vmatmul.mubr.bf16.gmra.mrb[0].mxu0 %v727
      %v964 = vpop.f32.mrb[0].mxu0
      %v965 = vadd.f32 %v768, %v964
      %v966 = vpop.f32.mrb[0].mxu0
      %v967 = vpop.f32.mrb[0].mxu0
      %v968 = vadd.f32 %v768, %v967
      %v969 = vpop.f32.mrb[0].mxu0
      %970 = vmatprep.mubr.bf16.mxu0 %v730
      %971 = vmatmul.mubr.bf16.gmra.mrb[0].mxu0 %v729
      %v972 = vpop.f32.mrb[0].mxu0
      %v973 = vadd.f32 %v768, %v972
      %v974 = vpop.f32.mrb[0].mxu0
      %v975 = vpop.f32.mrb[0].mxu0
      %v976 = vpop.f32.mrb[0].mxu0
      %977 = vdwg.mxu0
      %v978 = vpack.c.bf16 %v904, %v901
      %v979 = vpack.c.bf16 %v912, %v909
      %v980 = vpack.c.bf16 %v920, %v917
      %v981 = vpack.c.bf16 %v928, %v925
      %v982 = vpack.c.bf16 %v936, %v933
      %v983 = vpack.c.bf16 %v944, %v941
      %v984 = vpack.c.bf16 %v952, %v949
      %v985 = vpack.c.bf16 %v960, %v957
      %v986 = vpack.c.bf16 %v968, %v965
      %v987 = vpack.c.bf16 %v973, %v973
      %v988 = vtanh.bf16.pop %v978
      %v989 = vtanh.bf16.pop %v979
      %v990 = vtanh.bf16.pop %v980
      %v991 = vtanh.bf16.pop %v981
      %v992 = vtanh.bf16.pop %v982
      %v993 = vtanh.bf16.pop %v983
      %v994 = vtanh.bf16.pop %v984
      %v995 = vtanh.bf16.pop %v985
      %v996 = vtanh.bf16.pop %v986
      %v997 = vtanh.bf16.pop %v987
      %v998 = vld [vmem:[%s5] sm:$0xf]
      %v999 = vld [vmem:[%s5 + $0x4] sm:$0xf]
      %v1000 = vld [vmem:[%s5 + $0x8] sm:$0xf]
      %v1001 = vld [vmem:[%s5 + $0xc] sm:$0xf]
      %v1002 = vld [vmem:[%s5 + $0x10] sm:$0xf]
      %v1003 = vld [vmem:[%s5 + $0x14] sm:$0xf]
      %v1004 = vld [vmem:[%s5 + $0x18] sm:$0xf]
      %v1005 = vld [vmem:[%s5 + $0x1c] sm:$0xf]
      %v1006 = vld [vmem:[%s5 + $0x20] sm:$0xf]
      %v1007 = vld [vmem:[%s5 + $0x24] sm:$0xf]
      %v1008 = vld [vmem:[%s5 + $0x28] sm:$0xf]
      %v1009 = vld [vmem:[%s5 + $0x2c] sm:$0xf]
      %v1010 = vld [vmem:[%s5 + $0x30] sm:$0xf]
      %v1011 = vld [vmem:[%s5 + $0x34] sm:$0xf]
      %v1012 = vld [vmem:[%s5 + $0x38] sm:$0xf]
      %v1013 = vld [vmem:[%s5 + $0x3c] sm:$0xf]
      %v1014 = vld [vmem:[%s6] sm:$0x1]
      %v1016 = vlaneseq
      %v1017 = vshrl.u32 %v1016, 7
      %v1018 = vsub.s32 0, %v1017
      %v1019 = vrot.slane %v1014, %v1018
      %v1037 = vunpack.c.l.b16 %v998
      %v1038 = vunpack.c.l.b16 %v999
      %v1039 = vunpack.c.l.b16 %v1000
      %v1040 = vunpack.c.l.b16 %v1001
      %v1041 = vunpack.c.l.b16 %v1002
      %v1042 = vunpack.c.l.b16 %v1003
      %v1043 = vunpack.c.l.b16 %v1004
      %v1044 = vunpack.c.l.b16 %v1005
      %v1045 = vunpack.c.l.b16 %v1006
      %v1046 = vunpack.c.l.b16 %v1007
      %v1047 = vunpack.c.l.b16 %v1008
      %v1048 = vunpack.c.l.b16 %v1009
      %v1049 = vunpack.c.l.b16 %v1010
      %v1050 = vunpack.c.l.b16 %v1011
      %v1051 = vunpack.c.l.b16 %v1012
      %v1052 = vunpack.c.l.b16 %v1013
      %v1053 = vpack.c.b16 %v1038, %v1037
      %v1054 = vpack.c.b16 %v1040, %v1039
      %v1055 = vpack.c.b16 %v1042, %v1041
      %v1056 = vpack.c.b16 %v1044, %v1043
      %v1057 = vpack.c.b16 %v1046, %v1045
      %v1058 = vpack.c.b16 %v1048, %v1047
      %v1059 = vpack.c.b16 %v1050, %v1049
      %v1060 = vpack.c.b16 %v1052, %v1051
      %1069 = vmatprep.subr.bf16.mxu0 0
      %1070 = vmatpush1.bf16.msra.mxu0 %v1053
      %1071 = vmatprep.subr.bf16.mxu0 0
      %1072 = vmatpush1.bf16.msra.mxu0 %v1054
      %1073 = vmatprep.subr.bf16.mxu0 0
      %1074 = vmatpush1.bf16.msra.mxu0 %v1055
      %1075 = vmatprep.subr.bf16.mxu0 0
      %1076 = vmatpush1.bf16.msra.mxu0 %v1056
      %1077 = vmatprep.subr.bf16.mxu0 0
      %1078 = vmatpush1.bf16.msra.mxu0 %v1057
      %1079 = vmatprep.subr.bf16.mxu0 0
      %1080 = vmatpush1.bf16.msra.mxu0 %v1058
      %1081 = vmatprep.subr.bf16.mxu0 0
      %1082 = vmatpush1.bf16.msra.mxu0 %v1059
      %1083 = vmatprep.subr.bf16.mxu0 0
      %1084 = vmatpush1.bf16.msra.mxu0 %v1060
      %1085 = vmatprep.subr.bf16.mxu0 0
      %1086 = vmatpush1.bf16.msra.mxu0 0
      %1087 = vmatprep.subr.bf16.mxu0 0
      %1088 = vmatpush1.bf16.msra.mxu0 0
      %1089 = vmatprep.subr.bf16.mxu0 0
      %1090 = vmatpush1.bf16.msra.mxu0 0
      %1091 = vmatprep.subr.bf16.mxu0 0
      %1092 = vmatpush1.bf16.msra.mxu0 0
      %1093 = vmatprep.subr.bf16.mxu0 0
      %1094 = vmatpush1.bf16.msra.mxu0 0
      %1095 = vmatprep.subr.bf16.mxu0 0
      %1096 = vmatpush1.bf16.msra.mxu0 0
      %1097 = vmatprep.subr.bf16.mxu0 0
      %1098 = vmatpush1.bf16.msra.mxu0 0
      %1099 = vmatprep.subr.bf16.mxu0 0
      %1100 = vmatpush1.bf16.msra.mxu0 0
      %1101 = vmatprep.mubr.bf16.mxu0 0
      %1102 = vmatmul.mubr.bf16.gmra.mrb[0].mxu0 %v988
      %v1103 = vpop.f32.mrb[0].mxu0
      %v1104 = vadd.f32 %v1019, %v1103
      %v1105 = vpop.f32.mrb[0].mxu0
      %v1106 = vpop.f32.mrb[0].mxu0
      %v1107 = vadd.f32 %v1019, %v1106
      %v1108 = vpop.f32.mrb[0].mxu0
      %1109 = vmatprep.mubr.bf16.mxu0 0
      %1110 = vmatmul.mubr.bf16.gmra.mrb[0].mxu0 %v989
      %v1111 = vpop.f32.mrb[0].mxu0
      %v1112 = vadd.f32 %v1019, %v1111
      %v1113 = vpop.f32.mrb[0].mxu0
      %v1114 = vpop.f32.mrb[0].mxu0
      %v1115 = vadd.f32 %v1019, %v1114
      %v1116 = vpop.f32.mrb[0].mxu0
      %1117 = vmatprep.mubr.bf16.mxu0 0
      %1118 = vmatmul.mubr.bf16.gmra.mrb[0].mxu0 %v990
      %v1119 = vpop.f32.mrb[0].mxu0
      %v1120 = vadd.f32 %v1019, %v1119
      %v1121 = vpop.f32.mrb[0].mxu0
      %v1122 = vpop.f32.mrb[0].mxu0
      %v1123 = vadd.f32 %v1019, %v1122
      %v1124 = vpop.f32.mrb[0].mxu0
      %1125 = vmatprep.mubr.bf16.mxu0 0
      %1126 = vmatmul.mubr.bf16.gmra.mrb[0].mxu0 %v991
      %v1127 = vpop.f32.mrb[0].mxu0
      %v1128 = vadd.f32 %v1019, %v1127
      %v1129 = vpop.f32.mrb[0].mxu0
      %v1130 = vpop.f32.mrb[0].mxu0
      %v1131 = vadd.f32 %v1019, %v1130
      %v1132 = vpop.f32.mrb[0].mxu0
      %1133 = vmatprep.mubr.bf16.mxu0 0
      %1134 = vmatmul.mubr.bf16.gmra.mrb[0].mxu0 %v992
      %v1135 = vpop.f32.mrb[0].mxu0
      %v1136 = vadd.f32 %v1019, %v1135
      %v1137 = vpop.f32.mrb[0].mxu0
      %v1138 = vpop.f32.mrb[0].mxu0
      %v1139 = vadd.f32 %v1019, %v1138
      %v1140 = vpop.f32.mrb[0].mxu0
      %1141 = vmatprep.mubr.bf16.mxu0 0
      %1142 = vmatmul.mubr.bf16.gmra.mrb[0].mxu0 %v993
      %v1143 = vpop.f32.mrb[0].mxu0
      %v1144 = vadd.f32 %v1019, %v1143
      %v1145 = vpop.f32.mrb[0].mxu0
      %v1146 = vpop.f32.mrb[0].mxu0
      %v1147 = vadd.f32 %v1019, %v1146
      %v1148 = vpop.f32.mrb[0].mxu0
      %1149 = vmatprep.mubr.bf16.mxu0 0
      %1150 = vmatmul.mubr.bf16.gmra.mrb[0].mxu0 %v994
      %v1151 = vpop.f32.mrb[0].mxu0
      %v1152 = vadd.f32 %v1019, %v1151
      %v1153 = vpop.f32.mrb[0].mxu0
      %v1154 = vpop.f32.mrb[0].mxu0
      %v1155 = vadd.f32 %v1019, %v1154
      %v1156 = vpop.f32.mrb[0].mxu0
      %1157 = vmatprep.mubr.bf16.mxu0 0
      %1158 = vmatmul.mubr.bf16.gmra.mrb[0].mxu0 %v995
      %v1159 = vpop.f32.mrb[0].mxu0
      %v1160 = vadd.f32 %v1019, %v1159
      %v1161 = vpop.f32.mrb[0].mxu0
      %v1162 = vpop.f32.mrb[0].mxu0
      %v1163 = vadd.f32 %v1019, %v1162
      %v1164 = vpop.f32.mrb[0].mxu0
      %1165 = vmatprep.mubr.bf16.mxu0 0
      %1166 = vmatmul.mubr.bf16.gmra.mrb[0].mxu0 %v996
      %v1167 = vpop.f32.mrb[0].mxu0
      %v1168 = vadd.f32 %v1019, %v1167
      %v1169 = vpop.f32.mrb[0].mxu0
      %v1170 = vpop.f32.mrb[0].mxu0
      %v1171 = vadd.f32 %v1019, %v1170
      %v1172 = vpop.f32.mrb[0].mxu0
      %1173 = vmatprep.mubr.bf16.mxu0 0
      %1174 = vmatmul.mubr.bf16.gmra.mrb[0].mxu0 %v997
      %v1175 = vpop.f32.mrb[0].mxu0
      %v1176 = vadd.f32 %v1019, %v1175
      %v1177 = vpop.f32.mrb[0].mxu0
      %v1178 = vpop.f32.mrb[0].mxu0
      %v1179 = vpop.f32.mrb[0].mxu0
      %1180 = vdwg.mxu0
      %v1181 = vpack.c.bf16 %v1107, %v1104
      %v1182 = vpack.c.bf16 %v1115, %v1112
      %v1183 = vpack.c.bf16 %v1123, %v1120
      %v1184 = vpack.c.bf16 %v1131, %v1128
      %v1185 = vpack.c.bf16 %v1139, %v1136
      %v1186 = vpack.c.bf16 %v1147, %v1144
      %v1187 = vpack.c.bf16 %v1155, %v1152
      %v1188 = vpack.c.bf16 %v1163, %v1160
      %v1189 = vpack.c.bf16 %v1171, %v1168
      %v1190 = vpack.c.bf16 %v1176, %v1176
      %v1191 = vtanh.bf16.pop %v1181
      %v1192 = vtanh.bf16.pop %v1182
      %v1193 = vtanh.bf16.pop %v1183
      %v1194 = vtanh.bf16.pop %v1184
      %v1195 = vtanh.bf16.pop %v1185
      %v1196 = vtanh.bf16.pop %v1186
      %v1197 = vtanh.bf16.pop %v1187
      %v1198 = vtanh.bf16.pop %v1188
      %v1199 = vtanh.bf16.pop %v1189
      %v1200 = vtanh.bf16.pop %v1190
      %v1201 = vld [vmem:[%s7] sm:$0xff]
      %v1202 = vld [vmem:[%s7 + $0x8] sm:$0xff]
      %v1203 = vld [vmem:[%s7 + $0x10] sm:$0xff]
      %v1204 = vld [vmem:[%s7 + $0x18] sm:$0xff]
      %v1205 = vld [vmem:[%s7 + $0x20] sm:$0xff]
      %v1206 = vld [vmem:[%s7 + $0x28] sm:$0xff]
      %v1207 = vld [vmem:[%s7 + $0x30] sm:$0xff]
      %v1208 = vld [vmem:[%s7 + $0x38] sm:$0xff]
      %v1209 = vld [vmem:[%s7 + $0x40] sm:$0xff]
      %v1210 = vld [vmem:[%s7 + $0x48] sm:$0xff]
      %v1211 = vld [vmem:[%s7 + $0x50] sm:$0xff]
      %v1212 = vld [vmem:[%s7 + $0x58] sm:$0xff]
      %v1213 = vld [vmem:[%s7 + $0x60] sm:$0xff]
      %v1214 = vld [vmem:[%s7 + $0x68] sm:$0xff]
      %v1215 = vld [vmem:[%s7 + $0x70] sm:$0xff]
      %v1216 = vld [vmem:[%s7 + $0x78] sm:$0xff]
      %v1217 = vld [vmem:[%s8] sm:$0x3]
      %v1219 = vlaneseq
      %v1220 = vshrl.u32 %v1219, 7
      %v1221 = vsub.s32 0, %v1220
      %v1222 = vrot.slane %v1217, %v1221
      %v1223 = vlaneseq
      %v1224 = vshrl.u32 %v1223, 7
      %v1225 = vsub.s32 1, %v1224
      %v1226 = vrot.slane %v1217, %v1225
      %v1245 = vunpack.c.l.b16 %v1201
      %v1246 = vunpack.c.h.b16 %v1201
      %v1247 = vunpack.c.l.b16 %v1202
      %v1248 = vunpack.c.h.b16 %v1202
      %v1249 = vunpack.c.l.b16 %v1203
      %v1250 = vunpack.c.h.b16 %v1203
      %v1251 = vunpack.c.l.b16 %v1204
      %v1252 = vunpack.c.h.b16 %v1204
      %v1253 = vunpack.c.l.b16 %v1205
      %v1254 = vunpack.c.h.b16 %v1205
      %v1255 = vunpack.c.l.b16 %v1206
      %v1256 = vunpack.c.h.b16 %v1206
      %v1257 = vunpack.c.l.b16 %v1207
      %v1258 = vunpack.c.h.b16 %v1207
      %v1259 = vunpack.c.l.b16 %v1208
      %v1260 = vunpack.c.h.b16 %v1208
      %v1261 = vunpack.c.l.b16 %v1209
      %v1262 = vunpack.c.h.b16 %v1209
      %v1263 = vunpack.c.l.b16 %v1210
      %v1264 = vunpack.c.h.b16 %v1210
      %v1265 = vunpack.c.l.b16 %v1211
      %v1266 = vunpack.c.h.b16 %v1211
      %v1267 = vunpack.c.l.b16 %v1212
      %v1268 = vunpack.c.h.b16 %v1212
      %v1269 = vunpack.c.l.b16 %v1213
      %v1270 = vunpack.c.h.b16 %v1213
      %v1271 = vunpack.c.l.b16 %v1214
      %v1272 = vunpack.c.h.b16 %v1214
      %v1273 = vunpack.c.l.b16 %v1215
      %v1274 = vunpack.c.h.b16 %v1215
      %v1275 = vunpack.c.l.b16 %v1216
      %v1276 = vunpack.c.h.b16 %v1216
      %v1277 = vpack.c.b16 %v1247, %v1245
      %v1278 = vpack.c.b16 %v1248, %v1246
      %v1279 = vpack.c.b16 %v1251, %v1249
      %v1280 = vpack.c.b16 %v1252, %v1250
      %v1281 = vpack.c.b16 %v1255, %v1253
      %v1282 = vpack.c.b16 %v1256, %v1254
      %v1283 = vpack.c.b16 %v1259, %v1257
      %v1284 = vpack.c.b16 %v1260, %v1258
      %v1285 = vpack.c.b16 %v1263, %v1261
      %v1286 = vpack.c.b16 %v1264, %v1262
      %v1287 = vpack.c.b16 %v1267, %v1265
      %v1288 = vpack.c.b16 %v1268, %v1266
      %v1289 = vpack.c.b16 %v1271, %v1269
      %v1290 = vpack.c.b16 %v1272, %v1270
      %v1291 = vpack.c.b16 %v1275, %v1273
      %v1292 = vpack.c.b16 %v1276, %v1274
      %1309 = vmatprep.subr.bf16.mxu0 %v1278
      %1310 = vmatpush1.bf16.msra.mxu0 %v1277
      %1311 = vmatprep.subr.bf16.mxu0 %v1280
      %1312 = vmatpush1.bf16.msra.mxu0 %v1279
      %1313 = vmatprep.subr.bf16.mxu0 %v1282
      %1314 = vmatpush1.bf16.msra.mxu0 %v1281
      %1315 = vmatprep.subr.bf16.mxu0 %v1284
      %1316 = vmatpush1.bf16.msra.mxu0 %v1283
      %1317 = vmatprep.subr.bf16.mxu0 %v1286
      %1318 = vmatpush1.bf16.msra.mxu0 %v1285
      %1319 = vmatprep.subr.bf16.mxu0 %v1288
      %1320 = vmatpush1.bf16.msra.mxu0 %v1287
      %1321 = vmatprep.subr.bf16.mxu0 %v1290
      %1322 = vmatpush1.bf16.msra.mxu0 %v1289
      %1323 = vmatprep.subr.bf16.mxu0 %v1292
      %1324 = vmatpush1.bf16.msra.mxu0 %v1291
      %1325 = vmatprep.subr.bf16.mxu0 0
      %1326 = vmatpush1.bf16.msra.mxu0 0
      %1327 = vmatprep.subr.bf16.mxu0 0
      %1328 = vmatpush1.bf16.msra.mxu0 0
      %1329 = vmatprep.subr.bf16.mxu0 0
      %1330 = vmatpush1.bf16.msra.mxu0 0
      %1331 = vmatprep.subr.bf16.mxu0 0
      %1332 = vmatpush1.bf16.msra.mxu0 0
      %1333 = vmatprep.subr.bf16.mxu0 0
      %1334 = vmatpush1.bf16.msra.mxu0 0
      %1335 = vmatprep.subr.bf16.mxu0 0
      %1336 = vmatpush1.bf16.msra.mxu0 0
      %1337 = vmatprep.subr.bf16.mxu0 0
      %1338 = vmatpush1.bf16.msra.mxu0 0
      %1339 = vmatprep.subr.bf16.mxu0 0
      %1340 = vmatpush1.bf16.msra.mxu0 0
      %1341 = vmatprep.mubr.bf16.mxu0 0
      %1342 = vmatmul.mubr.bf16.gmra.mrb[0].mxu0 %v1191
      %v1343 = vpop.f32.mrb[0].mxu0
      %v1344 = vadd.f32 %v1222, %v1343
      %v1345 = vpop.f32.mrb[0].mxu0
      %v1346 = vadd.f32 %v1226, %v1345
      %v1347 = vpop.f32.mrb[0].mxu0
      %v1348 = vadd.f32 %v1222, %v1347
      %v1349 = vpop.f32.mrb[0].mxu0
      %v1350 = vadd.f32 %v1226, %v1349
      %1351 = vmatprep.mubr.bf16.mxu0 0
      %1352 = vmatmul.mubr.bf16.gmra.mrb[0].mxu0 %v1192
      %v1353 = vpop.f32.mrb[0].mxu0
      %v1354 = vadd.f32 %v1222, %v1353
      %v1355 = vpop.f32.mrb[0].mxu0
      %v1356 = vadd.f32 %v1226, %v1355
      %v1357 = vpop.f32.mrb[0].mxu0
      %v1358 = vadd.f32 %v1222, %v1357
      %v1359 = vpop.f32.mrb[0].mxu0
      %v1360 = vadd.f32 %v1226, %v1359
      %1361 = vmatprep.mubr.bf16.mxu0 0
      %1362 = vmatmul.mubr.bf16.gmra.mrb[0].mxu0 %v1193
      %v1363 = vpop.f32.mrb[0].mxu0
      %v1364 = vadd.f32 %v1222, %v1363
      %v1365 = vpop.f32.mrb[0].mxu0
      %v1366 = vadd.f32 %v1226, %v1365
      %v1367 = vpop.f32.mrb[0].mxu0
      %v1368 = vadd.f32 %v1222, %v1367
      %v1369 = vpop.f32.mrb[0].mxu0
      %v1370 = vadd.f32 %v1226, %v1369
      %1371 = vmatprep.mubr.bf16.mxu0 0
      %1372 = vmatmul.mubr.bf16.gmra.mrb[0].mxu0 %v1194
      %v1373 = vpop.f32.mrb[0].mxu0
      %v1374 = vadd.f32 %v1222, %v1373
      %v1375 = vpop.f32.mrb[0].mxu0
      %v1376 = vadd.f32 %v1226, %v1375
      %v1377 = vpop.f32.mrb[0].mxu0
      %v1378 = vadd.f32 %v1222, %v1377
      %v1379 = vpop.f32.mrb[0].mxu0
      %v1380 = vadd.f32 %v1226, %v1379
      %1381 = vmatprep.mubr.bf16.mxu0 0
      %1382 = vmatmul.mubr.bf16.gmra.mrb[0].mxu0 %v1195
      %v1383 = vpop.f32.mrb[0].mxu0
      %v1384 = vadd.f32 %v1222, %v1383
      %v1385 = vpop.f32.mrb[0].mxu0
      %v1386 = vadd.f32 %v1226, %v1385
      %v1387 = vpop.f32.mrb[0].mxu0
      %v1388 = vadd.f32 %v1222, %v1387
      %v1389 = vpop.f32.mrb[0].mxu0
      %v1390 = vadd.f32 %v1226, %v1389
      %1391 = vmatprep.mubr.bf16.mxu0 0
      %1392 = vmatmul.mubr.bf16.gmra.mrb[0].mxu0 %v1196
      %v1393 = vpop.f32.mrb[0].mxu0
      %v1394 = vadd.f32 %v1222, %v1393
      %v1395 = vpop.f32.mrb[0].mxu0
      %v1396 = vadd.f32 %v1226, %v1395
      %v1397 = vpop.f32.mrb[0].mxu0
      %v1398 = vadd.f32 %v1222, %v1397
      %v1399 = vpop.f32.mrb[0].mxu0
      %v1400 = vadd.f32 %v1226, %v1399
      %1401 = vmatprep.mubr.bf16.mxu0 0
      %1402 = vmatmul.mubr.bf16.gmra.mrb[0].mxu0 %v1197
      %v1403 = vpop.f32.mrb[0].mxu0
      %v1404 = vadd.f32 %v1222, %v1403
      %v1405 = vpop.f32.mrb[0].mxu0
      %v1406 = vadd.f32 %v1226, %v1405
      %v1407 = vpop.f32.mrb[0].mxu0
      %v1408 = vadd.f32 %v1222, %v1407
      %v1409 = vpop.f32.mrb[0].mxu0
      %v1410 = vadd.f32 %v1226, %v1409
      %1411 = vmatprep.mubr.bf16.mxu0 0
      %1412 = vmatmul.mubr.bf16.gmra.mrb[0].mxu0 %v1198
      %v1413 = vpop.f32.mrb[0].mxu0
      %v1414 = vadd.f32 %v1222, %v1413
      %v1415 = vpop.f32.mrb[0].mxu0
      %v1416 = vadd.f32 %v1226, %v1415
      %v1417 = vpop.f32.mrb[0].mxu0
      %v1418 = vadd.f32 %v1222, %v1417
      %v1419 = vpop.f32.mrb[0].mxu0
      %v1420 = vadd.f32 %v1226, %v1419
      %1421 = vmatprep.mubr.bf16.mxu0 0
      %1422 = vmatmul.mubr.bf16.gmra.mrb[0].mxu0 %v1199
      %v1423 = vpop.f32.mrb[0].mxu0
      %v1424 = vadd.f32 %v1222, %v1423
      %v1425 = vpop.f32.mrb[0].mxu0
      %v1426 = vadd.f32 %v1226, %v1425
      %v1427 = vpop.f32.mrb[0].mxu0
      %v1428 = vadd.f32 %v1222, %v1427
      %v1429 = vpop.f32.mrb[0].mxu0
      %v1430 = vadd.f32 %v1226, %v1429
      %1431 = vmatprep.mubr.bf16.mxu0 0
      %1432 = vmatmul.mubr.bf16.gmra.mrb[0].mxu0 %v1200
      %v1433 = vpop.f32.mrb[0].mxu0
      %v1434 = vadd.f32 %v1222, %v1433
      %v1435 = vpop.f32.mrb[0].mxu0
      %v1436 = vadd.f32 %v1226, %v1435
      %v1437 = vpop.f32.mrb[0].mxu0
      %v1438 = vpop.f32.mrb[0].mxu0
      %1439 = vdwg.mxu0
      %v1440 = vpack.c.bf16 %v1348, %v1344
      %v1441 = vpack.c.bf16 %v1350, %v1346
      %v1442 = vpack.c.bf16 %v1358, %v1354
      %v1443 = vpack.c.bf16 %v1360, %v1356
      %v1444 = vpack.c.bf16 %v1368, %v1364
      %v1445 = vpack.c.bf16 %v1370, %v1366
      %v1446 = vpack.c.bf16 %v1378, %v1374
      %v1447 = vpack.c.bf16 %v1380, %v1376
      %v1448 = vpack.c.bf16 %v1388, %v1384
      %v1449 = vpack.c.bf16 %v1390, %v1386
      %v1450 = vpack.c.bf16 %v1398, %v1394
      %v1451 = vpack.c.bf16 %v1400, %v1396
      %v1452 = vpack.c.bf16 %v1408, %v1404
      %v1453 = vpack.c.bf16 %v1410, %v1406
      %v1454 = vpack.c.bf16 %v1418, %v1414
      %v1455 = vpack.c.bf16 %v1420, %v1416
      %v1456 = vpack.c.bf16 %v1428, %v1424
      %v1457 = vpack.c.bf16 %v1430, %v1426
      %v1458 = vpack.c.bf16 %v1434, %v1434
      %v1459 = vpack.c.bf16 %v1436, %v1436
      %v1460 = vtanh.bf16.pop %v1440
      %v1461 = vtanh.bf16.pop %v1441
      %v1462 = vtanh.bf16.pop %v1442
      %v1463 = vtanh.bf16.pop %v1443
      %v1464 = vtanh.bf16.pop %v1444
      %v1465 = vtanh.bf16.pop %v1445
      %v1466 = vtanh.bf16.pop %v1446
      %v1467 = vtanh.bf16.pop %v1447
      %v1468 = vtanh.bf16.pop %v1448
      %v1469 = vtanh.bf16.pop %v1449
      %v1470 = vtanh.bf16.pop %v1450
      %v1471 = vtanh.bf16.pop %v1451
      %v1472 = vtanh.bf16.pop %v1452
      %v1473 = vtanh.bf16.pop %v1453
      %v1474 = vtanh.bf16.pop %v1454
      %v1475 = vtanh.bf16.pop %v1455
      %v1476 = vtanh.bf16.pop %v1456
      %v1477 = vtanh.bf16.pop %v1457
      %v1478 = vtanh.bf16.pop %v1458
      %v1479 = vtanh.bf16.pop %v1459
      %v1480 = vld [vmem:[%s9] sm:$0xf]
      %v1481 = vld [vmem:[%s9 + $0x4] sm:$0xf]
      %v1482 = vld [vmem:[%s9 + $0x8] sm:$0xf]
      %v1483 = vld [vmem:[%s9 + $0xc] sm:$0xf]
      %v1484 = vld [vmem:[%s9 + $0x10] sm:$0xf]
      %v1485 = vld [vmem:[%s9 + $0x14] sm:$0xf]
      %v1486 = vld [vmem:[%s9 + $0x18] sm:$0xf]
      %v1487 = vld [vmem:[%s9 + $0x1c] sm:$0xf]
      %v1488 = vld [vmem:[%s9 + $0x20] sm:$0xf]
      %v1489 = vld [vmem:[%s9 + $0x24] sm:$0xf]
      %v1490 = vld [vmem:[%s9 + $0x28] sm:$0xf]
      %v1491 = vld [vmem:[%s9 + $0x2c] sm:$0xf]
      %v1492 = vld [vmem:[%s9 + $0x30] sm:$0xf]
      %v1493 = vld [vmem:[%s9 + $0x34] sm:$0xf]
      %v1494 = vld [vmem:[%s9 + $0x38] sm:$0xf]
      %v1495 = vld [vmem:[%s9 + $0x3c] sm:$0xf]
      %v1496 = vld [vmem:[%s9 + $0x40] sm:$0xf]
      %v1497 = vld [vmem:[%s9 + $0x44] sm:$0xf]
      %v1498 = vld [vmem:[%s9 + $0x48] sm:$0xf]
      %v1499 = vld [vmem:[%s9 + $0x4c] sm:$0xf]
      %v1500 = vld [vmem:[%s9 + $0x50] sm:$0xf]
      %v1501 = vld [vmem:[%s9 + $0x54] sm:$0xf]
      %v1502 = vld [vmem:[%s9 + $0x58] sm:$0xf]
      %v1503 = vld [vmem:[%s9 + $0x5c] sm:$0xf]
      %v1504 = vld [vmem:[%s9 + $0x60] sm:$0xf]
      %v1505 = vld [vmem:[%s9 + $0x64] sm:$0xf]
      %v1506 = vld [vmem:[%s9 + $0x68] sm:$0xf]
      %v1507 = vld [vmem:[%s9 + $0x6c] sm:$0xf]
      %v1508 = vld [vmem:[%s9 + $0x70] sm:$0xf]
      %v1509 = vld [vmem:[%s9 + $0x74] sm:$0xf]
      %v1510 = vld [vmem:[%s9 + $0x78] sm:$0xf]
      %v1511 = vld [vmem:[%s9 + $0x7c] sm:$0xf]
      %v1512 = vld [vmem:[%s10] sm:$0x1]
      %v1514 = vlaneseq
      %v1515 = vshrl.u32 %v1514, 7
      %v1516 = vsub.s32 0, %v1515
      %v1517 = vrot.slane %v1512, %v1516
      %v1551 = vunpack.c.l.b16 %v1480
      %v1552 = vunpack.c.l.b16 %v1481
      %v1553 = vunpack.c.l.b16 %v1482
      %v1554 = vunpack.c.l.b16 %v1483
      %v1555 = vunpack.c.l.b16 %v1484
      %v1556 = vunpack.c.l.b16 %v1485
      %v1557 = vunpack.c.l.b16 %v1486
      %v1558 = vunpack.c.l.b16 %v1487
      %v1559 = vunpack.c.l.b16 %v1488
      %v1560 = vunpack.c.l.b16 %v1489
      %v1561 = vunpack.c.l.b16 %v1490
      %v1562 = vunpack.c.l.b16 %v1491
      %v1563 = vunpack.c.l.b16 %v1492
      %v1564 = vunpack.c.l.b16 %v1493
      %v1565 = vunpack.c.l.b16 %v1494
      %v1566 = vunpack.c.l.b16 %v1495
      %v1567 = vunpack.c.l.b16 %v1496
      %v1568 = vunpack.c.l.b16 %v1497
      %v1569 = vunpack.c.l.b16 %v1498
      %v1570 = vunpack.c.l.b16 %v1499
      %v1571 = vunpack.c.l.b16 %v1500
      %v1572 = vunpack.c.l.b16 %v1501
      %v1573 = vunpack.c.l.b16 %v1502
      %v1574 = vunpack.c.l.b16 %v1503
      %v1575 = vunpack.c.l.b16 %v1504
      %v1576 = vunpack.c.l.b16 %v1505
      %v1577 = vunpack.c.l.b16 %v1506
      %v1578 = vunpack.c.l.b16 %v1507
      %v1579 = vunpack.c.l.b16 %v1508
      %v1580 = vunpack.c.l.b16 %v1509
      %v1581 = vunpack.c.l.b16 %v1510
      %v1582 = vunpack.c.l.b16 %v1511
      %v1583 = vpack.c.b16 %v1552, %v1551
      %v1584 = vpack.c.b16 %v1554, %v1553
      %v1585 = vpack.c.b16 %v1556, %v1555
      %v1586 = vpack.c.b16 %v1558, %v1557
      %v1587 = vpack.c.b16 %v1560, %v1559
      %v1588 = vpack.c.b16 %v1562, %v1561
      %v1589 = vpack.c.b16 %v1564, %v1563
      %v1590 = vpack.c.b16 %v1566, %v1565
      %v1591 = vpack.c.b16 %v1568, %v1567
      %v1592 = vpack.c.b16 %v1570, %v1569
      %v1593 = vpack.c.b16 %v1572, %v1571
      %v1594 = vpack.c.b16 %v1574, %v1573
      %v1595 = vpack.c.b16 %v1576, %v1575
      %v1596 = vpack.c.b16 %v1578, %v1577
      %v1597 = vpack.c.b16 %v1580, %v1579
      %v1598 = vpack.c.b16 %v1582, %v1581
      %1615 = vmatprep.subr.bf16.mxu0 0
      %1616 = vmatpush1.bf16.msra.mxu0 %v1583
      %1617 = vmatprep.subr.bf16.mxu0 0
      %1618 = vmatpush1.bf16.msra.mxu0 %v1584
      %1619 = vmatprep.subr.bf16.mxu0 0
      %1620 = vmatpush1.bf16.msra.mxu0 %v1585
      %1621 = vmatprep.subr.bf16.mxu0 0
      %1622 = vmatpush1.bf16.msra.mxu0 %v1586
      %1623 = vmatprep.subr.bf16.mxu0 0
      %1624 = vmatpush1.bf16.msra.mxu0 %v1587
      %1625 = vmatprep.subr.bf16.mxu0 0
      %1626 = vmatpush1.bf16.msra.mxu0 %v1588
      %1627 = vmatprep.subr.bf16.mxu0 0
      %1628 = vmatpush1.bf16.msra.mxu0 %v1589
      %1629 = vmatprep.subr.bf16.mxu0 0
      %1630 = vmatpush1.bf16.msra.mxu0 %v1590
      %1631 = vmatprep.subr.bf16.mxu0 0
      %1632 = vmatpush1.bf16.msra.mxu0 %v1591
      %1633 = vmatprep.subr.bf16.mxu0 0
      %1634 = vmatpush1.bf16.msra.mxu0 %v1592
      %1635 = vmatprep.subr.bf16.mxu0 0
      %1636 = vmatpush1.bf16.msra.mxu0 %v1593
      %1637 = vmatprep.subr.bf16.mxu0 0
      %1638 = vmatpush1.bf16.msra.mxu0 %v1594
      %1639 = vmatprep.subr.bf16.mxu0 0
      %1640 = vmatpush1.bf16.msra.mxu0 %v1595
      %1641 = vmatprep.subr.bf16.mxu0 0
      %1642 = vmatpush1.bf16.msra.mxu0 %v1596
      %1643 = vmatprep.subr.bf16.mxu0 0
      %1644 = vmatpush1.bf16.msra.mxu0 %v1597
      %1645 = vmatprep.subr.bf16.mxu0 0
      %1646 = vmatpush1.bf16.msra.mxu0 %v1598
      %1647 = vmatprep.mubr.bf16.mxu0 %v1461
      %1648 = vmatmul.mubr.bf16.gmra.mrb[0].mxu0 %v1460
      %v1649 = vpop.f32.mrb[0].mxu0
      %v1650 = vadd.f32 %v1517, %v1649
      %v1651 = vpop.f32.mrb[0].mxu0
      %v1652 = vpop.f32.mrb[0].mxu0
      %v1653 = vadd.f32 %v1517, %v1652
      %v1654 = vpop.f32.mrb[0].mxu0
      %1655 = vmatprep.mubr.bf16.mxu0 %v1463
      %1656 = vmatmul.mubr.bf16.gmra.mrb[0].mxu0 %v1462
      %v1657 = vpop.f32.mrb[0].mxu0
      %v1658 = vadd.f32 %v1517, %v1657
      %v1659 = vpop.f32.mrb[0].mxu0
      %v1660 = vpop.f32.mrb[0].mxu0
      %v1661 = vadd.f32 %v1517, %v1660
      %v1662 = vpop.f32.mrb[0].mxu0
      %1663 = vmatprep.mubr.bf16.mxu0 %v1465
      %1664 = vmatmul.mubr.bf16.gmra.mrb[0].mxu0 %v1464
      %v1665 = vpop.f32.mrb[0].mxu0
      %v1666 = vadd.f32 %v1517, %v1665
      %v1667 = vpop.f32.mrb[0].mxu0
      %v1668 = vpop.f32.mrb[0].mxu0
      %v1669 = vadd.f32 %v1517, %v1668
      %v1670 = vpop.f32.mrb[0].mxu0
      %1671 = vmatprep.mubr.bf16.mxu0 %v1467
      %1672 = vmatmul.mubr.bf16.gmra.mrb[0].mxu0 %v1466
      %v1673 = vpop.f32.mrb[0].mxu0
      %v1674 = vadd.f32 %v1517, %v1673
      %v1675 = vpop.f32.mrb[0].mxu0
      %v1676 = vpop.f32.mrb[0].mxu0
      %v1677 = vadd.f32 %v1517, %v1676
      %v1678 = vpop.f32.mrb[0].mxu0
      %1679 = vmatprep.mubr.bf16.mxu0 %v1469
      %1680 = vmatmul.mubr.bf16.gmra.mrb[0].mxu0 %v1468
      %v1681 = vpop.f32.mrb[0].mxu0
      %v1682 = vadd.f32 %v1517, %v1681
      %v1683 = vpop.f32.mrb[0].mxu0
      %v1684 = vpop.f32.mrb[0].mxu0
      %v1685 = vadd.f32 %v1517, %v1684
      %v1686 = vpop.f32.mrb[0].mxu0
      %1687 = vmatprep.mubr.bf16.mxu0 %v1471
      %1688 = vmatmul.mubr.bf16.gmra.mrb[0].mxu0 %v1470
      %v1689 = vpop.f32.mrb[0].mxu0
      %v1690 = vadd.f32 %v1517, %v1689
      %v1691 = vpop.f32.mrb[0].mxu0
      %v1692 = vpop.f32.mrb[0].mxu0
      %v1693 = vadd.f32 %v1517, %v1692
      %v1694 = vpop.f32.mrb[0].mxu0
      %1695 = vmatprep.mubr.bf16.mxu0 %v1473
      %1696 = vmatmul.mubr.bf16.gmra.mrb[0].mxu0 %v1472
      %v1697 = vpop.f32.mrb[0].mxu0
      %v1698 = vadd.f32 %v1517, %v1697
      %v1699 = vpop.f32.mrb[0].mxu0
      %v1700 = vpop.f32.mrb[0].mxu0
      %v1701 = vadd.f32 %v1517, %v1700
      %v1702 = vpop.f32.mrb[0].mxu0
      %1703 = vmatprep.mubr.bf16.mxu0 %v1475
      %1704 = vmatmul.mubr.bf16.gmra.mrb[0].mxu0 %v1474
      %v1705 = vpop.f32.mrb[0].mxu0
      %v1706 = vadd.f32 %v1517, %v1705
      %v1707 = vpop.f32.mrb[0].mxu0
      %v1708 = vpop.f32.mrb[0].mxu0
      %v1709 = vadd.f32 %v1517, %v1708
      %v1710 = vpop.f32.mrb[0].mxu0
      %1711 = vmatprep.mubr.bf16.mxu0 %v1477
      %1712 = vmatmul.mubr.bf16.gmra.mrb[0].mxu0 %v1476
      %v1713 = vpop.f32.mrb[0].mxu0
      %v1714 = vadd.f32 %v1517, %v1713
      %v1715 = vpop.f32.mrb[0].mxu0
      %v1716 = vpop.f32.mrb[0].mxu0
      %v1717 = vadd.f32 %v1517, %v1716
      %v1718 = vpop.f32.mrb[0].mxu0
      %1719 = vmatprep.mubr.bf16.mxu0 %v1479
      %1720 = vmatmul.mubr.bf16.gmra.mrb[0].mxu0 %v1478
      %v1721 = vpop.f32.mrb[0].mxu0
      %v1722 = vadd.f32 %v1517, %v1721
      %v1723 = vpop.f32.mrb[0].mxu0
      %v1724 = vpop.f32.mrb[0].mxu0
      %v1725 = vpop.f32.mrb[0].mxu0
      %1726 = vdwg.mxu0
      %1727 = vst.msk [vmem:[%s388] sm:$0xff] %vm420, %v1650
      %1728 = vst.msk [vmem:[%s388 + $0x8] sm:$0xff] %vm420, %v1653
      %1729 = vst.msk [vmem:[%s388 + $0x10] sm:$0xff] %vm420, %v1658
      %1730 = vst.msk [vmem:[%s388 + $0x18] sm:$0xff] %vm420, %v1661
      %1731 = vst.msk [vmem:[%s388 + $0x20] sm:$0xff] %vm420, %v1666
      %1732 = vst.msk [vmem:[%s388 + $0x28] sm:$0xff] %vm420, %v1669
      %1733 = vst.msk [vmem:[%s388 + $0x30] sm:$0xff] %vm420, %v1674
      %1734 = vst.msk [vmem:[%s388 + $0x38] sm:$0xff] %vm420, %v1677
      %1735 = vst.msk [vmem:[%s388 + $0x40] sm:$0xff] %vm420, %v1682
      %1736 = vst.msk [vmem:[%s388 + $0x48] sm:$0xff] %vm420, %v1685
      %1737 = vst.msk [vmem:[%s388 + $0x50] sm:$0xff] %vm420, %v1690
      %1738 = vst.msk [vmem:[%s388 + $0x58] sm:$0xff] %vm420, %v1693
      %1739 = vst.msk [vmem:[%s388 + $0x60] sm:$0xff] %vm420, %v1698
      %1740 = vst.msk [vmem:[%s388 + $0x68] sm:$0xff] %vm420, %v1701
      %1741 = vst.msk [vmem:[%s388 + $0x70] sm:$0xff] %vm420, %v1706
      %1742 = vst.msk [vmem:[%s388 + $0x78] sm:$0xff] %vm420, %v1709
      %1743 = vst.msk [vmem:[%s388 + $0x80] sm:$0xff] %vm420, %v1714
      %1744 = vst.msk [vmem:[%s388 + $0x88] sm:$0xff] %vm420, %v1717
      %1745 = vst.msk [vmem:[%s388 + $0x90] sm:$0xff] %vm420, %v1722
      %s1746 = smul.u32 19, %s22
      %p1747 = scmp.lt.s32.totalorder %s1746, 37
      %s1748 = scalar_select %p1747, %s1746, 37
      %s1749 = smul.addr %s1748, 8
      %s1750 = scalar_lea.vmem %s11, %s1749
      // Predicated region
      $region65: #{tpu_custom_call.1} parent=63 // pred_check
        %p1751 = pneg %p276
      $region66: #{tpu_custom_call.1} parent=63 // pred_check_branch
        %1753 = sbr.rel (%p1751) target = $region68
      $region67: #{tpu_custom_call.1} parent=63 // pred_region
        %s1754 = smul.u32 19, %s22
      $region68: #{tpu_custom_call.1} parent=63 // pred_fallthru
        _
    $region64: #{tpu_custom_call.1} parent=5 // pred_fallthru
      _
    %p1755 = scmp.le.s32.totalorder 2, %s17
    // Predicated region
    $region69: #{tpu_custom_call.1} parent=5 // pred_check
      %p1756 = pneg %p1755
    $region70: #{tpu_custom_call.1} parent=5 // pred_check_branch
      %1758 = sbr.rel (%p1756) target = $region72
    $region71: #{tpu_custom_call.1} parent=5 // pred_region
      %s1759 = ssub.s32 %s17, 2
      // Predicated region
      $region73: #{tpu_custom_call.1} parent=71 // pred_check
        %p1760 = pneg %p282
      $region74: #{tpu_custom_call.1} parent=71 // pred_check_branch
        %1762 = sbr.rel (%p1760) target = $region76
      $region75: #{tpu_custom_call.1} parent=71 // pred_region
        %s1763 = smul.u32 19, %s23
        %p1764 = scmp.lt.s32.totalorder %s1763, 37
        %s1765 = scalar_select %p1764, %s1763, 37
        %s1766 = smul.addr %s1765, 8
        %s1767 = scalar_lea.vmem %s11, %s1766
      $region76: #{tpu_custom_call.1} parent=71 // pred_fallthru
        _
    $region72: #{tpu_custom_call.1} parent=5 // pred_fallthru
      _
  $region6: #{tpu_custom_call.1} parent=0 // loop_footer
    %s21 = sadd.s32 1, %s17
  $region7: #{tpu_custom_call.1} parent=0 // loop_footer_branch
    %16 = sbr.rel target = $region3
  $region8: #{tpu_custom_call.1} parent=0 // loop_exit
    _

</llo_original>
